<compile_context>
chip_gen: v7x
topology: tpu7x:2x2x1
jax: 0.10.0
libtpu: 0.0.40
codegen_flags: <defaults>
</compile_context>

<pallas_src>
import functools

import jax
import jax.numpy as jnp
from jax.experimental import pallas as pl
from jax.experimental.pallas import tpu as pltpu

F_IN = 28 * 28      # 784
LATENT = 3
LANE = 128

# encoder 784->256->128->64->12->3, decoder 3->12->64->128->256->784
ENC_DIMS = [(F_IN, 256), (256, 128), (128, 64), (64, 12), (12, LATENT)]
DEC_DIMS = [(LATENT, 12), (12, 64), (64, 128), (128, 256), (256, F_IN)]
ALL_DIMS = ENC_DIMS + DEC_DIMS
N_LAYERS = len(ALL_DIMS)  # 10


def _pad_dim(d: int) -> int:
    # Lane-pad every narrow width to 128; 256 / 784 stay as-is (784 is the
    # full array dim, which BlockSpec allows, and the MXU handles K=784 fine).
    return d if d >= LANE else LANE


PAD_DIMS = [(_pad_dim(fi), _pad_dim(fo)) for fi, fo in ALL_DIMS]
LATENT_PAD = _pad_dim(LATENT)  # 128


def _round_up(n: int, m: int) -> int:
    return ((n + m - 1) // m) * m


# --------------------------------------------------------------------------
# Kernel
# --------------------------------------------------------------------------
def _layer_chain(h_f32, param_refs):
    """Run the fused 10-layer chain on one activation tile.

    Returns (encoded, decoded), both f32, with lane-padded widths (128 / 784).
    Matmuls take bf16 inputs with f32 accumulation; bias add / tanh in f32.
    """
    h = h_f32
    encoded = None
    for i in range(N_LAYERS):
        w = param_refs[2 * i][...]          # bf16 (in_pad, out_pad)
        b = param_refs[2 * i + 1][...]      # f32  (1, out_pad)
        acc = jnp.dot(h.astype(jnp.bfloat16), w,
                      preferred_element_type=jnp.float32) + b
        if i == 4:                           # latent Linear: no activation
            encoded = acc
            h = acc
        elif i == N_LAYERS - 1:              # sigmoid(x) == 0.5*(tanh(0.5x)+1)
            h = 0.5 * (jnp.tanh(0.5 * acc) + 1.0)
        else:
            h = jnp.tanh(acc)
    return encoded, h


def autoencoder_kernel(x_ref, *refs):
    """refs = (w0, b0, ..., w9, b9, encoded_ref, decoded_ref).

    x_ref: (TB, 784) batch tile (f32). Weights/biases are full arrays with a
    constant index_map -> VMEM-resident, DMA'd once. The layer chain is fully
    unrolled; for TB >= 16 it is run on two independent half-tiles so the
    scheduler has cross-chain ILP to hide MXU drain / EUP latency.
    """
    param_refs = refs[: 2 * N_LAYERS]
    enc_ref = refs[2 * N_LAYERS]
    dec_ref = refs[2 * N_LAYERS + 1]

    tb = x_ref.shape[0]
    if tb >= 16 and tb % 16 == 0:
        half = tb // 2
        e0, d0 = _layer_chain(x_ref[:half, :], param_refs)
        e1, d1 = _layer_chain(x_ref[half:, :], param_refs)
        enc_ref[:half, :] = e0.astype(enc_ref.dtype)
        enc_ref[half:, :] = e1.astype(enc_ref.dtype)
        dec_ref[:half, :] = d0.astype(dec_ref.dtype)
        dec_ref[half:, :] = d1.astype(dec_ref.dtype)
    else:
        e, d = _layer_chain(x_ref[...], param_refs)
        enc_ref[...] = e.astype(enc_ref.dtype)
        dec_ref[...] = d.astype(dec_ref.dtype)


# --------------------------------------------------------------------------
# Parameters
# --------------------------------------------------------------------------
def init_params(key):
    """PyTorch nn.Linear default init: U(-1/sqrt(fan_in), 1/sqrt(fan_in)).
    Weights stored as (in, out) (pre-transposed vs. PyTorch); biases (1, out)."""
    params = []
    for fan_in, fan_out in ALL_DIMS:
        key, kw, kb = jax.random.split(key, 3)
        bound = 1.0 / jnp.sqrt(jnp.float32(fan_in))
        params.append(
            jax.random.uniform(kw, (fan_in, fan_out), jnp.float32, -bound, bound))
        params.append(
            jax.random.uniform(kb, (1, fan_out), jnp.float32, -bound, bound))
    return params


def prepare_params(params):
    """One-time (outside the jitted hot path): zero-pad all sub-128 widths to
    128 (exact through linear + tanh since padded rows/cols/biases are zero)
    and cast weights to bf16. Biases stay f32 for the f32 accumulator add."""
    prepared = []
    for i, ((fi, fo), (fip, fop)) in enumerate(zip(ALL_DIMS, PAD_DIMS)):
        w = jnp.pad(params[2 * i], ((0, fip - fi), (0, fop - fo)))
        b = jnp.pad(params[2 * i + 1], ((0, 0), (0, fop - fo)))
        prepared.append(w.astype(jnp.bfloat16))
        prepared.append(b.astype(jnp.float32))
    return prepared


# --------------------------------------------------------------------------
# Forward
# --------------------------------------------------------------------------
@functools.partial(jax.jit, static_argnames=("tb",))
def autoencoder_forward(x, prepared_params, tb=None):
    B = x.shape[0]
    if tb is None:
        # >= ~4 grid steps for large batches (v7x megacore + pipelining),
        # floor 256 for MXU utilization, cap 1024 for VMEM headroom.
        tb = min(max(256, _round_up(-(-B // 4), 8)), 1024)
    TB = min(tb, _round_up(B, 8))          # sublane-aligned batch tile
    num_tiles = pl.cdiv(B, TB)             # partial last tile handled by Pallas

    # --- block specs: activations tiled over batch, params VMEM-resident ---
    x_spec = pl.BlockSpec((TB, F_IN), lambda i: (i, 0))
    param_specs = [pl.BlockSpec(p.shape, lambda i: (0, 0)) for p in prepared_params]
    enc_spec = pl.BlockSpec((TB, LATENT_PAD), lambda i: (i, 0))
    dec_spec = pl.BlockSpec((TB, F_IN), lambda i: (i, 0))

    # --- advisory cost estimate ---
    flops_per_row = 2 * sum(fi * fo for fi, fo in PAD_DIMS)   # ~1.13 MFLOP/row
    transc_per_row = (256 + 128 + 128 + 128) + (128 + 128 + 128 + 256) + F_IN
    weight_bytes = int(sum(p.size * p.dtype.itemsize for p in prepared_params))
    cost = pl.CostEstimate(
        flops=B * flops_per_row,
        transcendentals=B * transc_per_row,
        bytes_accessed=B * (2 * F_IN + LATENT_PAD) * 4 + weight_bytes,
    )

    encoded_pad, decoded = pl.pallas_call(
        autoencoder_kernel,
        grid=(num_tiles,),
        out_shape=(
            jax.ShapeDtypeStruct((B, LATENT_PAD), jnp.float32),  # encoded (lane-dense)
            jax.ShapeDtypeStruct((B, F_IN), jnp.float32),        # decoded
        ),
        in_specs=[x_spec] + param_specs,
        out_specs=(enc_spec, dec_spec),
        compiler_params=pltpu.CompilerParams(
            dimension_semantics=("parallel",),       # 2x on v7x, no-op elsewhere
            vmem_limit_bytes=48 * 1024 * 1024,       # headroom for TB up to 1024
        ),
        cost_estimate=cost,
    )(x, *prepared_params)

    # Only the latent slice leaves padded form (B x 3 copy, negligible).
    return encoded_pad[:, :LATENT], decoded


# --------------------------------------------------------------------------
# Pure-JAX references
# --------------------------------------------------------------------------
def reference_forward_matched(x, prepared_params):
    """Same numerics as the kernel (bf16 matmul inputs, f32 accumulation)."""
    h = x
    encoded = None
    for i in range(N_LAYERS):
        w = prepared_params[2 * i]
        b = prepared_params[2 * i + 1]
        h = jnp.dot(h.astype(jnp.bfloat16), w,
                    preferred_element_type=jnp.float32) + b
        if i == 4:
            encoded = h
        elif i == N_LAYERS - 1:
            h = jax.nn.sigmoid(h)
        else:
            h = jnp.tanh(h)
    return encoded[:, :LATENT], h


def reference_forward_f32(x, params):
    """Full-f32 reference of the original module (loose check: bf16 weights
    introduce ~1e-3 relative error by design)."""
    h = x
    encoded = None
    for i in range(N_LAYERS):
        w, b = params[2 * i], params[2 * i + 1]
        h = h @ w + b
        if i == 4:
            encoded = h
        elif i == N_LAYERS - 1:
            h = jax.nn.sigmoid(h)
        else:
            h = jnp.tanh(h)
    return encoded, h


if __name__ == "__main__":
    key = jax.random.PRNGKey(0)
    key_x, key_p = jax.random.split(key)
    params = init_params(key_p)
    prepared = prepare_params(params)          # one-time pad + bf16 cast

    # Small batch: single grid step, TB clamps to 8 (no half-split path).
    B = 8
    x = jax.random.uniform(key_x, (B, F_IN), jnp.float32)
    encoded, decoded = autoencoder_forward(x, prepared)
    jax.block_until_ready((encoded, decoded))
    assert encoded.shape == (B, LATENT) and decoded.shape == (B, F_IN)

    enc_m, dec_m = reference_forward_matched(x, prepared)
    assert jnp.allclose(encoded, enc_m, atol=1e-4, rtol=1e-4)
    assert jnp.allclose(decoded, dec_m, atol=1e-4, rtol=1e-4)

    enc_f, dec_f = reference_forward_f32(x, params)
    assert jnp.allclose(encoded, enc_f, atol=5e-2, rtol=5e-2)
    assert jnp.allclose(decoded, dec_f, atol=5e-2, rtol=5e-2)

    # Multi-tile batch: exercises TB=256 grid of 3 steps, a partial last
    # block (no wrapper batch padding), and the two-half-tile ILP path.
    B2 = 600
    x2 = jax.random.uniform(key_x, (B2, F_IN), jnp.float32)
    enc2, dec2 = autoencoder_forward(x2, prepared)
    jax.block_until_ready((enc2, dec2))
    assert enc2.shape == (B2, LATENT) and dec2.shape == (B2, F_IN)

    enc2_m, dec2_m = reference_forward_matched(x2, prepared)
    assert jnp.allclose(enc2, enc2_m, atol=1e-4, rtol=1e-4)
    assert jnp.allclose(dec2, dec2_m, atol=1e-4, rtol=1e-4)

    print("KERNEL_OK")
</pallas_src>

<mosaic_0001>
module attributes {stable_mosaic.version = 11 : i64} {
  func.func @autoencoder_kernel(%arg0: i32, %arg1: memref<8x784xf32, #tpu.memory_space<vmem>>, %arg2: memref<784x256xbf16, #tpu.memory_space<vmem>>, %arg3: memref<1x256xf32, #tpu.memory_space<vmem>>, %arg4: memref<256x128xbf16, #tpu.memory_space<vmem>>, %arg5: memref<1x128xf32, #tpu.memory_space<vmem>>, %arg6: memref<128x128xbf16, #tpu.memory_space<vmem>>, %arg7: memref<1x128xf32, #tpu.memory_space<vmem>>, %arg8: memref<128x128xbf16, #tpu.memory_space<vmem>>, %arg9: memref<1x128xf32, #tpu.memory_space<vmem>>, %arg10: memref<128x128xbf16, #tpu.memory_space<vmem>>, %arg11: memref<1x128xf32, #tpu.memory_space<vmem>>, %arg12: memref<128x128xbf16, #tpu.memory_space<vmem>>, %arg13: memref<1x128xf32, #tpu.memory_space<vmem>>, %arg14: memref<128x128xbf16, #tpu.memory_space<vmem>>, %arg15: memref<1x128xf32, #tpu.memory_space<vmem>>, %arg16: memref<128x128xbf16, #tpu.memory_space<vmem>>, %arg17: memref<1x128xf32, #tpu.memory_space<vmem>>, %arg18: memref<128x256xbf16, #tpu.memory_space<vmem>>, %arg19: memref<1x256xf32, #tpu.memory_space<vmem>>, %arg20: memref<256x784xbf16, #tpu.memory_space<vmem>>, %arg21: memref<1x784xf32, #tpu.memory_space<vmem>>, %arg22: memref<8x128xf32, #tpu.memory_space<vmem>>, %arg23: memref<8x784xf32, #tpu.memory_space<vmem>>) attributes {dimension_semantics = [#tpu.dimension_semantics<parallel>], iteration_bounds = array<i64: 1>, scalar_prefetch = 0 : i64, scratch_operands = 0 : i64, tpu.core_type = #tpu.core_type<tc>, window_params = [{transform_indices = @transform_0, window_bounds = array<i64: 8, 784>}, {pipeline_mode = #tpu.pipeline_mode<synchronous>, transform_indices = @transform_1, window_bounds = array<i64: 784, 256>}, {pipeline_mode = #tpu.pipeline_mode<synchronous>, transform_indices = @transform_2, window_bounds = array<i64: 1, 256>}, {pipeline_mode = #tpu.pipeline_mode<synchronous>, transform_indices = @transform_3, window_bounds = array<i64: 256, 128>}, {pipeline_mode = #tpu.pipeline_mode<synchronous>, transform_indices = @transform_4, window_bounds = array<i64: 1, 128>}, {pipeline_mode = #tpu.pipeline_mode<synchronous>, transform_indices = @transform_5, window_bounds = array<i64: 128, 128>}, {pipeline_mode = #tpu.pipeline_mode<synchronous>, transform_indices = @transform_6, window_bounds = array<i64: 1, 128>}, {pipeline_mode = #tpu.pipeline_mode<synchronous>, transform_indices = @transform_7, window_bounds = array<i64: 128, 128>}, {pipeline_mode = #tpu.pipeline_mode<synchronous>, transform_indices = @transform_8, window_bounds = array<i64: 1, 128>}, {pipeline_mode = #tpu.pipeline_mode<synchronous>, transform_indices = @transform_9, window_bounds = array<i64: 128, 128>}, {pipeline_mode = #tpu.pipeline_mode<synchronous>, transform_indices = @transform_10, window_bounds = array<i64: 1, 128>}, {pipeline_mode = #tpu.pipeline_mode<synchronous>, transform_indices = @transform_11, window_bounds = array<i64: 128, 128>}, {pipeline_mode = #tpu.pipeline_mode<synchronous>, transform_indices = @transform_12, window_bounds = array<i64: 1, 128>}, {pipeline_mode = #tpu.pipeline_mode<synchronous>, transform_indices = @transform_13, window_bounds = array<i64: 128, 128>}, {pipeline_mode = #tpu.pipeline_mode<synchronous>, transform_indices = @transform_14, window_bounds = array<i64: 1, 128>}, {pipeline_mode = #tpu.pipeline_mode<synchronous>, transform_indices = @transform_15, window_bounds = array<i64: 128, 128>}, {pipeline_mode = #tpu.pipeline_mode<synchronous>, transform_indices = @transform_16, window_bounds = array<i64: 1, 128>}, {pipeline_mode = #tpu.pipeline_mode<synchronous>, transform_indices = @transform_17, window_bounds = array<i64: 128, 256>}, {pipeline_mode = #tpu.pipeline_mode<synchronous>, transform_indices = @transform_18, window_bounds = array<i64: 1, 256>}, {pipeline_mode = #tpu.pipeline_mode<synchronous>, transform_indices = @transform_19, window_bounds = array<i64: 256, 784>}, {pipeline_mode = #tpu.pipeline_mode<synchronous>, transform_indices = @transform_20, window_bounds = array<i64: 1, 784>}, {transform_indices = @transform_21, window_bounds = array<i64: 8, 128>}, {transform_indices = @transform_22, window_bounds = array<i64: 8, 784>}]} {
    %c0 = arith.constant 0 : index
    %c0_0 = arith.constant 0 : index
    %0 = vector.load %arg1[%c0, %c0_0] : memref<8x784xf32, #tpu.memory_space<vmem>>, vector<8x784xf32>
    %c0_1 = arith.constant 0 : index
    %c0_2 = arith.constant 0 : index
    %1 = vector.load %arg2[%c0_1, %c0_2] : memref<784x256xbf16, #tpu.memory_space<vmem>>, vector<784x256xbf16>
    %c0_3 = arith.constant 0 : index
    %c0_4 = arith.constant 0 : index
    %2 = vector.load %arg3[%c0_3, %c0_4] : memref<1x256xf32, #tpu.memory_space<vmem>>, vector<1x256xf32>
    %3 = arith.truncf %0 : vector<8x784xf32> to vector<8x784xbf16>
    %cst = arith.constant dense<0.000000e+00> : vector<8x256xf32>
    %4 = tpu.matmul %3, %1, %cst {dimension_numbers = #tpu.dot_dimension_numbers<[1], [0], [0], [1], [0, 0, 1, 1], [], []>} : vector<8x784xbf16>, vector<784x256xbf16>, vector<8x256xf32> -> vector<8x256xf32>
    %5 = vector.broadcast %2 : vector<1x256xf32> to vector<8x256xf32>
    %6 = arith.addf %4, %5 : vector<8x256xf32>
    %7 = math.tanh %6 : vector<8x256xf32>
    %c0_5 = arith.constant 0 : index
    %c0_6 = arith.constant 0 : index
    %8 = vector.load %arg4[%c0_5, %c0_6] : memref<256x128xbf16, #tpu.memory_space<vmem>>, vector<256x128xbf16>
    %c0_7 = arith.constant 0 : index
    %c0_8 = arith.constant 0 : index
    %9 = vector.load %arg5[%c0_7, %c0_8] : memref<1x128xf32, #tpu.memory_space<vmem>>, vector<1x128xf32>
    %10 = arith.truncf %7 : vector<8x256xf32> to vector<8x256xbf16>
    %cst_9 = arith.constant dense<0.000000e+00> : vector<8x128xf32>
    %11 = tpu.matmul %10, %8, %cst_9 {dimension_numbers = #tpu.dot_dimension_numbers<[1], [0], [0], [1], [0, 0, 1, 1], [], []>} : vector<8x256xbf16>, vector<256x128xbf16>, vector<8x128xf32> -> vector<8x128xf32>
    %12 = vector.broadcast %9 : vector<1x128xf32> to vector<8x128xf32>
    %13 = arith.addf %11, %12 : vector<8x128xf32>
    %14 = math.tanh %13 : vector<8x128xf32>
    %c0_10 = arith.constant 0 : index
    %c0_11 = arith.constant 0 : index
    %15 = vector.load %arg6[%c0_10, %c0_11] : memref<128x128xbf16, #tpu.memory_space<vmem>>, vector<128x128xbf16>
    %c0_12 = arith.constant 0 : index
    %c0_13 = arith.constant 0 : index
    %16 = vector.load %arg7[%c0_12, %c0_13] : memref<1x128xf32, #tpu.memory_space<vmem>>, vector<1x128xf32>
    %17 = arith.truncf %14 : vector<8x128xf32> to vector<8x128xbf16>
    %cst_14 = arith.constant dense<0.000000e+00> : vector<8x128xf32>
    %18 = tpu.matmul %17, %15, %cst_14 {dimension_numbers = #tpu.dot_dimension_numbers<[1], [0], [0], [1], [0, 0, 1, 1], [], []>} : vector<8x128xbf16>, vector<128x128xbf16>, vector<8x128xf32> -> vector<8x128xf32>
    %19 = vector.broadcast %16 : vector<1x128xf32> to vector<8x128xf32>
    %20 = arith.addf %18, %19 : vector<8x128xf32>
    %21 = math.tanh %20 : vector<8x128xf32>
    %c0_15 = arith.constant 0 : index
    %c0_16 = arith.constant 0 : index
    %22 = vector.load %arg8[%c0_15, %c0_16] : memref<128x128xbf16, #tpu.memory_space<vmem>>, vector<128x128xbf16>
    %c0_17 = arith.constant 0 : index
    %c0_18 = arith.constant 0 : index
    %23 = vector.load %arg9[%c0_17, %c0_18] : memref<1x128xf32, #tpu.memory_space<vmem>>, vector<1x128xf32>
    %24 = arith.truncf %21 : vector<8x128xf32> to vector<8x128xbf16>
    %cst_19 = arith.constant dense<0.000000e+00> : vector<8x128xf32>
    %25 = tpu.matmul %24, %22, %cst_19 {dimension_numbers = #tpu.dot_dimension_numbers<[1], [0], [0], [1], [0, 0, 1, 1], [], []>} : vector<8x128xbf16>, vector<128x128xbf16>, vector<8x128xf32> -> vector<8x128xf32>
    %26 = vector.broadcast %23 : vector<1x128xf32> to vector<8x128xf32>
    %27 = arith.addf %25, %26 : vector<8x128xf32>
    %28 = math.tanh %27 : vector<8x128xf32>
    %c0_20 = arith.constant 0 : index
    %c0_21 = arith.constant 0 : index
    %29 = vector.load %arg10[%c0_20, %c0_21] : memref<128x128xbf16, #tpu.memory_space<vmem>>, vector<128x128xbf16>
    %c0_22 = arith.constant 0 : index
    %c0_23 = arith.constant 0 : index
    %30 = vector.load %arg11[%c0_22, %c0_23] : memref<1x128xf32, #tpu.memory_space<vmem>>, vector<1x128xf32>
    %31 = arith.truncf %28 : vector<8x128xf32> to vector<8x128xbf16>
    %cst_24 = arith.constant dense<0.000000e+00> : vector<8x128xf32>
    %32 = tpu.matmul %31, %29, %cst_24 {dimension_numbers = #tpu.dot_dimension_numbers<[1], [0], [0], [1], [0, 0, 1, 1], [], []>} : vector<8x128xbf16>, vector<128x128xbf16>, vector<8x128xf32> -> vector<8x128xf32>
    %33 = vector.broadcast %30 : vector<1x128xf32> to vector<8x128xf32>
    %34 = arith.addf %32, %33 : vector<8x128xf32>
    %c0_25 = arith.constant 0 : index
    %c0_26 = arith.constant 0 : index
    %35 = vector.load %arg12[%c0_25, %c0_26] : memref<128x128xbf16, #tpu.memory_space<vmem>>, vector<128x128xbf16>
    %c0_27 = arith.constant 0 : index
    %c0_28 = arith.constant 0 : index
    %36 = vector.load %arg13[%c0_27, %c0_28] : memref<1x128xf32, #tpu.memory_space<vmem>>, vector<1x128xf32>
    %37 = arith.truncf %34 : vector<8x128xf32> to vector<8x128xbf16>
    %cst_29 = arith.constant dense<0.000000e+00> : vector<8x128xf32>
    %38 = tpu.matmul %37, %35, %cst_29 {dimension_numbers = #tpu.dot_dimension_numbers<[1], [0], [0], [1], [0, 0, 1, 1], [], []>} : vector<8x128xbf16>, vector<128x128xbf16>, vector<8x128xf32> -> vector<8x128xf32>
    %39 = vector.broadcast %36 : vector<1x128xf32> to vector<8x128xf32>
    %40 = arith.addf %38, %39 : vector<8x128xf32>
    %41 = math.tanh %40 : vector<8x128xf32>
    %c0_30 = arith.constant 0 : index
    %c0_31 = arith.constant 0 : index
    %42 = vector.load %arg14[%c0_30, %c0_31] : memref<128x128xbf16, #tpu.memory_space<vmem>>, vector<128x128xbf16>
    %c0_32 = arith.constant 0 : index
    %c0_33 = arith.constant 0 : index
    %43 = vector.load %arg15[%c0_32, %c0_33] : memref<1x128xf32, #tpu.memory_space<vmem>>, vector<1x128xf32>
    %44 = arith.truncf %41 : vector<8x128xf32> to vector<8x128xbf16>
    %cst_34 = arith.constant dense<0.000000e+00> : vector<8x128xf32>
    %45 = tpu.matmul %44, %42, %cst_34 {dimension_numbers = #tpu.dot_dimension_numbers<[1], [0], [0], [1], [0, 0, 1, 1], [], []>} : vector<8x128xbf16>, vector<128x128xbf16>, vector<8x128xf32> -> vector<8x128xf32>
    %46 = vector.broadcast %43 : vector<1x128xf32> to vector<8x128xf32>
    %47 = arith.addf %45, %46 : vector<8x128xf32>
    %48 = math.tanh %47 : vector<8x128xf32>
    %c0_35 = arith.constant 0 : index
    %c0_36 = arith.constant 0 : index
    %49 = vector.load %arg16[%c0_35, %c0_36] : memref<128x128xbf16, #tpu.memory_space<vmem>>, vector<128x128xbf16>
    %c0_37 = arith.constant 0 : index
    %c0_38 = arith.constant 0 : index
    %50 = vector.load %arg17[%c0_37, %c0_38] : memref<1x128xf32, #tpu.memory_space<vmem>>, vector<1x128xf32>
    %51 = arith.truncf %48 : vector<8x128xf32> to vector<8x128xbf16>
    %cst_39 = arith.constant dense<0.000000e+00> : vector<8x128xf32>
    %52 = tpu.matmul %51, %49, %cst_39 {dimension_numbers = #tpu.dot_dimension_numbers<[1], [0], [0], [1], [0, 0, 1, 1], [], []>} : vector<8x128xbf16>, vector<128x128xbf16>, vector<8x128xf32> -> vector<8x128xf32>
    %53 = vector.broadcast %50 : vector<1x128xf32> to vector<8x128xf32>
    %54 = arith.addf %52, %53 : vector<8x128xf32>
    %55 = math.tanh %54 : vector<8x128xf32>
    %c0_40 = arith.constant 0 : index
    %c0_41 = arith.constant 0 : index
    %56 = vector.load %arg18[%c0_40, %c0_41] : memref<128x256xbf16, #tpu.memory_space<vmem>>, vector<128x256xbf16>
    %c0_42 = arith.constant 0 : index
    %c0_43 = arith.constant 0 : index
    %57 = vector.load %arg19[%c0_42, %c0_43] : memref<1x256xf32, #tpu.memory_space<vmem>>, vector<1x256xf32>
    %58 = arith.truncf %55 : vector<8x128xf32> to vector<8x128xbf16>
    %cst_44 = arith.constant dense<0.000000e+00> : vector<8x256xf32>
    %59 = tpu.matmul %58, %56, %cst_44 {dimension_numbers = #tpu.dot_dimension_numbers<[1], [0], [0], [1], [0, 0, 1, 1], [], []>} : vector<8x128xbf16>, vector<128x256xbf16>, vector<8x256xf32> -> vector<8x256xf32>
    %60 = vector.broadcast %57 : vector<1x256xf32> to vector<8x256xf32>
    %61 = arith.addf %59, %60 : vector<8x256xf32>
    %62 = math.tanh %61 : vector<8x256xf32>
    %c0_45 = arith.constant 0 : index
    %c0_46 = arith.constant 0 : index
    %63 = vector.load %arg20[%c0_45, %c0_46] : memref<256x784xbf16, #tpu.memory_space<vmem>>, vector<256x784xbf16>
    %c0_47 = arith.constant 0 : index
    %c0_48 = arith.constant 0 : index
    %64 = vector.load %arg21[%c0_47, %c0_48] : memref<1x784xf32, #tpu.memory_space<vmem>>, vector<1x784xf32>
    %65 = arith.truncf %62 : vector<8x256xf32> to vector<8x256xbf16>
    %cst_49 = arith.constant dense<0.000000e+00> : vector<8x784xf32>
    %66 = tpu.matmul %65, %63, %cst_49 {dimension_numbers = #tpu.dot_dimension_numbers<[1], [0], [0], [1], [0, 0, 1, 1], [], []>} : vector<8x256xbf16>, vector<256x784xbf16>, vector<8x784xf32> -> vector<8x784xf32>
    %67 = vector.broadcast %64 : vector<1x784xf32> to vector<8x784xf32>
    %68 = arith.addf %66, %67 : vector<8x784xf32>
    %cst_50 = arith.constant 5.000000e-01 : f32
    %69 = vector.broadcast %cst_50 : f32 to vector<8x784xf32>
    %70 = arith.mulf %69, %68 : vector<8x784xf32>
    %71 = math.tanh %70 : vector<8x784xf32>
    %cst_51 = arith.constant 1.000000e+00 : f32
    %72 = vector.broadcast %cst_51 : f32 to vector<8x784xf32>
    %73 = arith.addf %71, %72 : vector<8x784xf32>
    %cst_52 = arith.constant 5.000000e-01 : f32
    %74 = vector.broadcast %cst_52 : f32 to vector<8x784xf32>
    %75 = arith.mulf %74, %73 : vector<8x784xf32>
    %c0_53 = arith.constant 0 : index
    %c0_54 = arith.constant 0 : index
    %76 = vector.load %arg22[%c0_53, %c0_54] : memref<8x128xf32, #tpu.memory_space<vmem>>, vector<8x128xf32>
    tpu.vector_store %arg22[%c0_53, %c0_54], %34 {strides = array<i32>} : memref<8x128xf32, #tpu.memory_space<vmem>>, vector<8x128xf32>,
    %c0_55 = arith.constant 0 : index
    %c0_56 = arith.constant 0 : index
    %77 = vector.load %arg23[%c0_55, %c0_56] : memref<8x784xf32, #tpu.memory_space<vmem>>, vector<8x784xf32>
    tpu.vector_store %arg23[%c0_55, %c0_56], %75 {strides = array<i32>} : memref<8x784xf32, #tpu.memory_space<vmem>>, vector<8x784xf32>,
    return
  }
  func.func @transform_0(%arg0: i32) -> (i32, i32) {
    %c0_i32 = arith.constant 0 : i32
    %c0_i32_0 = arith.constant 0 : i32
    return %arg0, %c0_i32 : i32, i32
  }
  func.func @transform_1(%arg0: i32) -> (i32, i32) {
    %c0_i32 = arith.constant 0 : i32
    %c0_i32_0 = arith.constant 0 : i32
    %c0_i32_1 = arith.constant 0 : i32
    return %c0_i32, %c0_i32_0 : i32, i32
  }
  func.func @transform_2(%arg0: i32) -> (i32, i32) {
    %c0_i32 = arith.constant 0 : i32
    %c0_i32_0 = arith.constant 0 : i32
    %c0_i32_1 = arith.constant 0 : i32
    return %c0_i32, %c0_i32_0 : i32, i32
  }
  func.func @transform_3(%arg0: i32) -> (i32, i32) {
    %c0_i32 = arith.constant 0 : i32
    %c0_i32_0 = arith.constant 0 : i32
    %c0_i32_1 = arith.constant 0 : i32
    return %c0_i32, %c0_i32_0 : i32, i32
  }
  func.func @transform_4(%arg0: i32) -> (i32, i32) {
    %c0_i32 = arith.constant 0 : i32
    %c0_i32_0 = arith.constant 0 : i32
    %c0_i32_1 = arith.constant 0 : i32
    return %c0_i32, %c0_i32_0 : i32, i32
  }
  func.func @transform_5(%arg0: i32) -> (i32, i32) {
    %c0_i32 = arith.constant 0 : i32
    %c0_i32_0 = arith.constant 0 : i32
    %c0_i32_1 = arith.constant 0 : i32
    return %c0_i32, %c0_i32_0 : i32, i32
  }
  func.func @transform_6(%arg0: i32) -> (i32, i32) {
    %c0_i32 = arith.constant 0 : i32
    %c0_i32_0 = arith.constant 0 : i32
    %c0_i32_1 = arith.constant 0 : i32
    return %c0_i32, %c0_i32_0 : i32, i32
  }
  func.func @transform_7(%arg0: i32) -> (i32, i32) {
    %c0_i32 = arith.constant 0 : i32
    %c0_i32_0 = arith.constant 0 : i32
    %c0_i32_1 = arith.constant 0 : i32
    return %c0_i32, %c0_i32_0 : i32, i32
  }
  func.func @transform_8(%arg0: i32) -> (i32, i32) {
    %c0_i32 = arith.constant 0 : i32
    %c0_i32_0 = arith.constant 0 : i32
    %c0_i32_1 = arith.constant 0 : i32
    return %c0_i32, %c0_i32_0 : i32, i32
  }
  func.func @transform_9(%arg0: i32) -> (i32, i32) {
    %c0_i32 = arith.constant 0 : i32
    %c0_i32_0 = arith.constant 0 : i32
    %c0_i32_1 = arith.constant 0 : i32
    return %c0_i32, %c0_i32_0 : i32, i32
  }
  func.func @transform_10(%arg0: i32) -> (i32, i32) {
    %c0_i32 = arith.constant 0 : i32
    %c0_i32_0 = arith.constant 0 : i32
    %c0_i32_1 = arith.constant 0 : i32
    return %c0_i32, %c0_i32_0 : i32, i32
  }
  func.func @transform_11(%arg0: i32) -> (i32, i32) {
    %c0_i32 = arith.constant 0 : i32
    %c0_i32_0 = arith.constant 0 : i32
    %c0_i32_1 = arith.constant 0 : i32
    return %c0_i32, %c0_i32_0 : i32, i32
  }
  func.func @transform_12(%arg0: i32) -> (i32, i32) {
    %c0_i32 = arith.constant 0 : i32
    %c0_i32_0 = arith.constant 0 : i32
    %c0_i32_1 = arith.constant 0 : i32
    return %c0_i32, %c0_i32_0 : i32, i32
  }
  func.func @transform_13(%arg0: i32) -> (i32, i32) {
    %c0_i32 = arith.constant 0 : i32
    %c0_i32_0 = arith.constant 0 : i32
    %c0_i32_1 = arith.constant 0 : i32
    return %c0_i32, %c0_i32_0 : i32, i32
  }
  func.func @transform_14(%arg0: i32) -> (i32, i32) {
    %c0_i32 = arith.constant 0 : i32
    %c0_i32_0 = arith.constant 0 : i32
    %c0_i32_1 = arith.constant 0 : i32
    return %c0_i32, %c0_i32_0 : i32, i32
  }
  func.func @transform_15(%arg0: i32) -> (i32, i32) {
    %c0_i32 = arith.constant 0 : i32
    %c0_i32_0 = arith.constant 0 : i32
    %c0_i32_1 = arith.constant 0 : i32
    return %c0_i32, %c0_i32_0 : i32, i32
  }
  func.func @transform_16(%arg0: i32) -> (i32, i32) {
    %c0_i32 = arith.constant 0 : i32
    %c0_i32_0 = arith.constant 0 : i32
    %c0_i32_1 = arith.constant 0 : i32
    return %c0_i32, %c0_i32_0 : i32, i32
  }
  func.func @transform_17(%arg0: i32) -> (i32, i32) {
    %c0_i32 = arith.constant 0 : i32
    %c0_i32_0 = arith.constant 0 : i32
    %c0_i32_1 = arith.constant 0 : i32
    return %c0_i32, %c0_i32_0 : i32, i32
  }
  func.func @transform_18(%arg0: i32) -> (i32, i32) {
    %c0_i32 = arith.constant 0 : i32
    %c0_i32_0 = arith.constant 0 : i32
    %c0_i32_1 = arith.constant 0 : i32
    return %c0_i32, %c0_i32_0 : i32, i32
  }
  func.func @transform_19(%arg0: i32) -> (i32, i32) {
    %c0_i32 = arith.constant 0 : i32
    %c0_i32_0 = arith.constant 0 : i32
    %c0_i32_1 = arith.constant 0 : i32
    return %c0_i32, %c0_i32_0 : i32, i32
  }
  func.func @transform_20(%arg0: i32) -> (i32, i32) {
    %c0_i32 = arith.constant 0 : i32
    %c0_i32_0 = arith.constant 0 : i32
    %c0_i32_1 = arith.constant 0 : i32
    return %c0_i32, %c0_i32_0 : i32, i32
  }
  func.func @transform_21(%arg0: i32) -> (i32, i32) {
    %c0_i32 = arith.constant 0 : i32
    %c0_i32_0 = arith.constant 0 : i32
    return %arg0, %c0_i32 : i32, i32
  }
  func.func @transform_22(%arg0: i32) -> (i32, i32) {
    %c0_i32 = arith.constant 0 : i32
    %c0_i32_0 = arith.constant 0 : i32
    return %arg0, %c0_i32 : i32, i32
  }
}

</mosaic_0001>

<llo_original>
// kernel: autoencoder_forward.1
$region0: #{autoencoder_forward.1}
  #allocation0 [shape = 'u32[]', space=smem, size = 0x4, offset = 0x4, fixed_abs, tag = 'smem constant byte address 0x4 - core index']
  #allocation1 [shape = 'u32[144,128]{1,0:T(1,128)}', space=vmem, size = 0x12000, scoped, tag = 'internal scratch']
  %s0 = inlined_call_operand.vmem [shape: f32[8,784], index: 0, kind: input, shape index: {}]
  %s1 = inlined_call_operand.vmem [shape: bf16[784,256], index: 1, kind: input, shape index: {}]
  %s2 = inlined_call_operand.vmem [shape: f32[1,256], index: 2, kind: input, shape index: {}]
  %s3 = inlined_call_operand.vmem [shape: bf16[256,128], index: 3, kind: input, shape index: {}]
  %s4 = inlined_call_operand.vmem [shape: f32[1,128], index: 4, kind: input, shape index: {}]
  %s5 = inlined_call_operand.vmem [shape: bf16[128,128], index: 5, kind: input, shape index: {}]
  %s6 = inlined_call_operand.vmem [shape: f32[1,128], index: 6, kind: input, shape index: {}]
  %s7 = inlined_call_operand.vmem [shape: bf16[128,128], index: 7, kind: input, shape index: {}]
  %s8 = inlined_call_operand.vmem [shape: f32[1,128], index: 8, kind: input, shape index: {}]
  %s9 = inlined_call_operand.vmem [shape: bf16[128,128], index: 9, kind: input, shape index: {}]
  %s10 = inlined_call_operand.vmem [shape: f32[1,128], index: 10, kind: input, shape index: {}]
  %s11 = inlined_call_operand.vmem [shape: bf16[128,128], index: 11, kind: input, shape index: {}]
  %s12 = inlined_call_operand.vmem [shape: f32[1,128], index: 12, kind: input, shape index: {}]
  %s13 = inlined_call_operand.vmem [shape: bf16[128,128], index: 13, kind: input, shape index: {}]
  %s14 = inlined_call_operand.vmem [shape: f32[1,128], index: 14, kind: input, shape index: {}]
  %s15 = inlined_call_operand.vmem [shape: bf16[128,128], index: 15, kind: input, shape index: {}]
  %s16 = inlined_call_operand.vmem [shape: f32[1,128], index: 16, kind: input, shape index: {}]
  %s17 = inlined_call_operand.vmem [shape: bf16[128,256], index: 17, kind: input, shape index: {}]
  %s18 = inlined_call_operand.vmem [shape: f32[1,256], index: 18, kind: input, shape index: {}]
  %s19 = inlined_call_operand.vmem [shape: bf16[256,784], index: 19, kind: input, shape index: {}]
  %s20 = inlined_call_operand.vmem [shape: f32[1,784], index: 20, kind: input, shape index: {}]
  %s21 = inlined_call_operand.vmem [shape: f32[8,128], index: 21, kind: output, shape index: {0}]
  %s22 = inlined_call_operand.hbm [shape: f32[8,784], index: 22, kind: output, shape index: {1}]
  %23 = xla_tuple %s21, %s22
  %s24 = sld [smem:[#allocation0]]
  $region102: #{autoencoder_forward.1} parent=0
    _
  %s26 = ssub.s32 1, %s24
  %s27 = scalar_select 0, %s26, %s24
  $region1: #{autoencoder_forward.1} parent=0
    #allocation2 [shape = 'u8[28672]{0}', space=vmem, size = 0x7000, scoped, tag = 'output window, operand 1, single buffered']
    #allocation3 [shape = 's32[1]{0}', space=sflag, size = 0x4, scoped, tag = 'scoped memory for autoencoder_forward.1']
    %28 = vsyncpa [#allocation3], 0
    // Predicated region
    $region2: #{autoencoder_forward.1} parent=1 // pred_check
      _
    $region3: #{autoencoder_forward.1} parent=1 // pred_check_branch
      %30 = sbr.rel (0) target = $region5
    $region4: #{autoencoder_forward.1} parent=1 // pred_region
      _
    $region5: #{autoencoder_forward.1} parent=1 // pred_fallthru
      _
    // Predicated region
    $region6: #{autoencoder_forward.1} parent=1 // pred_check
      _
    $region7: #{autoencoder_forward.1} parent=1 // pred_check_branch
      %32 = sbr.rel (0) target = $region9
    $region8: #{autoencoder_forward.1} parent=1 // pred_region
      _
    $region9: #{autoencoder_forward.1} parent=1 // pred_fallthru
      _
    // Predicated region
    $region10: #{autoencoder_forward.1} parent=1 // pred_check
      _
    $region11: #{autoencoder_forward.1} parent=1 // pred_check_branch
      %34 = sbr.rel (0) target = $region13
    $region12: #{autoencoder_forward.1} parent=1 // pred_region
      _
    $region13: #{autoencoder_forward.1} parent=1 // pred_fallthru
      _
    // Predicated region
    $region14: #{autoencoder_forward.1} parent=1 // pred_check
      _
    $region15: #{autoencoder_forward.1} parent=1 // pred_check_branch
      %36 = sbr.rel (0) target = $region17
    $region16: #{autoencoder_forward.1} parent=1 // pred_region
      _
    $region17: #{autoencoder_forward.1} parent=1 // pred_fallthru
      _
    // Predicated region
    $region18: #{autoencoder_forward.1} parent=1 // pred_check
      _
    $region19: #{autoencoder_forward.1} parent=1 // pred_check_branch
      %38 = sbr.rel (0) target = $region21
    $region20: #{autoencoder_forward.1} parent=1 // pred_region
      _
    $region21: #{autoencoder_forward.1} parent=1 // pred_fallthru
      _
    // Predicated region
    $region22: #{autoencoder_forward.1} parent=1 // pred_check
      _
    $region23: #{autoencoder_forward.1} parent=1 // pred_check_branch
      %40 = sbr.rel (0) target = $region25
    $region24: #{autoencoder_forward.1} parent=1 // pred_region
      _
    $region25: #{autoencoder_forward.1} parent=1 // pred_fallthru
      _
    // Predicated region
    $region26: #{autoencoder_forward.1} parent=1 // pred_check
      _
    $region27: #{autoencoder_forward.1} parent=1 // pred_check_branch
      %42 = sbr.rel (0) target = $region29
    $region28: #{autoencoder_forward.1} parent=1 // pred_region
      _
    $region29: #{autoencoder_forward.1} parent=1 // pred_fallthru
      _
    // Predicated region
    $region30: #{autoencoder_forward.1} parent=1 // pred_check
      _
    $region31: #{autoencoder_forward.1} parent=1 // pred_check_branch
      %44 = sbr.rel (0) target = $region33
    $region32: #{autoencoder_forward.1} parent=1 // pred_region
      _
    $region33: #{autoencoder_forward.1} parent=1 // pred_fallthru
      _
    // Predicated region
    $region34: #{autoencoder_forward.1} parent=1 // pred_check
      _
    $region35: #{autoencoder_forward.1} parent=1 // pred_check_branch
      %46 = sbr.rel (0) target = $region37
    $region36: #{autoencoder_forward.1} parent=1 // pred_region
      _
    $region37: #{autoencoder_forward.1} parent=1 // pred_fallthru
      _
    // Predicated region
    $region38: #{autoencoder_forward.1} parent=1 // pred_check
      _
    $region39: #{autoencoder_forward.1} parent=1 // pred_check_branch
      %48 = sbr.rel (0) target = $region41
    $region40: #{autoencoder_forward.1} parent=1 // pred_region
      _
    $region41: #{autoencoder_forward.1} parent=1 // pred_fallthru
      _
    // Predicated region
    $region42: #{autoencoder_forward.1} parent=1 // pred_check
      _
    $region43: #{autoencoder_forward.1} parent=1 // pred_check_branch
      %50 = sbr.rel (0) target = $region45
    $region44: #{autoencoder_forward.1} parent=1 // pred_region
      _
    $region45: #{autoencoder_forward.1} parent=1 // pred_fallthru
      _
    // Predicated region
    $region46: #{autoencoder_forward.1} parent=1 // pred_check
      _
    $region47: #{autoencoder_forward.1} parent=1 // pred_check_branch
      %52 = sbr.rel (0) target = $region49
    $region48: #{autoencoder_forward.1} parent=1 // pred_region
      _
    $region49: #{autoencoder_forward.1} parent=1 // pred_fallthru
      _
    // Predicated region
    $region50: #{autoencoder_forward.1} parent=1 // pred_check
      _
    $region51: #{autoencoder_forward.1} parent=1 // pred_check_branch
      %54 = sbr.rel (0) target = $region53
    $region52: #{autoencoder_forward.1} parent=1 // pred_region
      _
    $region53: #{autoencoder_forward.1} parent=1 // pred_fallthru
      _
    // Predicated region
    $region54: #{autoencoder_forward.1} parent=1 // pred_check
      _
    $region55: #{autoencoder_forward.1} parent=1 // pred_check_branch
      %56 = sbr.rel (0) target = $region57
    $region56: #{autoencoder_forward.1} parent=1 // pred_region
      _
    $region57: #{autoencoder_forward.1} parent=1 // pred_fallthru
      _
    // Predicated region
    $region58: #{autoencoder_forward.1} parent=1 // pred_check
      _
    $region59: #{autoencoder_forward.1} parent=1 // pred_check_branch
      %58 = sbr.rel (0) target = $region61
    $region60: #{autoencoder_forward.1} parent=1 // pred_region
      _
    $region61: #{autoencoder_forward.1} parent=1 // pred_fallthru
      _
    // Predicated region
    $region62: #{autoencoder_forward.1} parent=1 // pred_check
      _
    $region63: #{autoencoder_forward.1} parent=1 // pred_check_branch
      %60 = sbr.rel (0) target = $region65
    $region64: #{autoencoder_forward.1} parent=1 // pred_region
      _
    $region65: #{autoencoder_forward.1} parent=1 // pred_fallthru
      _
    // Predicated region
    $region66: #{autoencoder_forward.1} parent=1 // pred_check
      _
    $region67: #{autoencoder_forward.1} parent=1 // pred_check_branch
      %62 = sbr.rel (0) target = $region69
    $region68: #{autoencoder_forward.1} parent=1 // pred_region
      _
    $region69: #{autoencoder_forward.1} parent=1 // pred_fallthru
      _
    // Predicated region
    $region70: #{autoencoder_forward.1} parent=1 // pred_check
      _
    $region71: #{autoencoder_forward.1} parent=1 // pred_check_branch
      %64 = sbr.rel (0) target = $region73
    $region72: #{autoencoder_forward.1} parent=1 // pred_region
      _
    $region73: #{autoencoder_forward.1} parent=1 // pred_fallthru
      _
    // Predicated region
    $region74: #{autoencoder_forward.1} parent=1 // pred_check
      _
    $region75: #{autoencoder_forward.1} parent=1 // pred_check_branch
      %66 = sbr.rel (0) target = $region77
    $region76: #{autoencoder_forward.1} parent=1 // pred_region
      _
    $region77: #{autoencoder_forward.1} parent=1 // pred_fallthru
      _
    // Predicated region
    $region78: #{autoencoder_forward.1} parent=1 // pred_check
      _
    $region79: #{autoencoder_forward.1} parent=1 // pred_check_branch
      %68 = sbr.rel (0) target = $region81
    $region80: #{autoencoder_forward.1} parent=1 // pred_region
      _
    $region81: #{autoencoder_forward.1} parent=1 // pred_fallthru
      _
    // Predicated region
    $region82: #{autoencoder_forward.1} parent=1 // pred_check
      _
    $region83: #{autoencoder_forward.1} parent=1 // pred_check_branch
      %70 = sbr.rel (0) target = $region85
    $region84: #{autoencoder_forward.1} parent=1 // pred_region
      _
    $region85: #{autoencoder_forward.1} parent=1 // pred_fallthru
      _
    %v72 = vld [vmem:[%s0] sm:$0xff]
    %v73 = vld [vmem:[%s0 + $0x8] sm:$0xff]
    %v74 = vld [vmem:[%s0 + $0x10] sm:$0xff]
    %v75 = vld [vmem:[%s0 + $0x18] sm:$0xff]
    %v76 = vld [vmem:[%s0 + $0x20] sm:$0xff]
    %v77 = vld [vmem:[%s0 + $0x28] sm:$0xff]
    %v78 = vld [vmem:[%s0 + $0x30] sm:$0xff]
    %v79 = vld [vmem:[%s1] sm:$0xff]
    %v80 = vld [vmem:[%s1 + $0x8] sm:$0xff]
    %v81 = vld [vmem:[%s1 + $0x10] sm:$0xff]
    %v82 = vld [vmem:[%s1 + $0x18] sm:$0xff]
    %v83 = vld [vmem:[%s1 + $0x20] sm:$0xff]
    %v84 = vld [vmem:[%s1 + $0x28] sm:$0xff]
    %v85 = vld [vmem:[%s1 + $0x30] sm:$0xff]
    %v86 = vld [vmem:[%s1 + $0x38] sm:$0xff]
    %v87 = vld [vmem:[%s1 + $0x40] sm:$0xff]
    %v88 = vld [vmem:[%s1 + $0x48] sm:$0xff]
    %v89 = vld [vmem:[%s1 + $0x50] sm:$0xff]
    %v90 = vld [vmem:[%s1 + $0x58] sm:$0xff]
    %v91 = vld [vmem:[%s1 + $0x60] sm:$0xff]
    %v92 = vld [vmem:[%s1 + $0x68] sm:$0xff]
    %v93 = vld [vmem:[%s1 + $0x70] sm:$0xff]
    %v94 = vld [vmem:[%s1 + $0x78] sm:$0xff]
    %v95 = vld [vmem:[%s1 + $0x80] sm:$0xff]
    %v96 = vld [vmem:[%s1 + $0x88] sm:$0xff]
    %v97 = vld [vmem:[%s1 + $0x90] sm:$0xff]
    %v98 = vld [vmem:[%s1 + $0x98] sm:$0xff]
    %v99 = vld [vmem:[%s1 + $0xa0] sm:$0xff]
    %v100 = vld [vmem:[%s1 + $0xa8] sm:$0xff]
    %v101 = vld [vmem:[%s1 + $0xb0] sm:$0xff]
    %v102 = vld [vmem:[%s1 + $0xb8] sm:$0xff]
    %v103 = vld [vmem:[%s1 + $0xc0] sm:$0xff]
    %v104 = vld [vmem:[%s1 + $0xc8] sm:$0xff]
    %v105 = vld [vmem:[%s1 + $0xd0] sm:$0xff]
    %v106 = vld [vmem:[%s1 + $0xd8] sm:$0xff]
    %v107 = vld [vmem:[%s1 + $0xe0] sm:$0xff]
    %v108 = vld [vmem:[%s1 + $0xe8] sm:$0xff]
    %v109 = vld [vmem:[%s1 + $0xf0] sm:$0xff]
    %v110 = vld [vmem:[%s1 + $0xf8] sm:$0xff]
    %v111 = vld [vmem:[%s1 + $0x100] sm:$0xff]
    %v112 = vld [vmem:[%s1 + $0x108] sm:$0xff]
    %v113 = vld [vmem:[%s1 + $0x110] sm:$0xff]
    %v114 = vld [vmem:[%s1 + $0x118] sm:$0xff]
    %v115 = vld [vmem:[%s1 + $0x120] sm:$0xff]
    %v116 = vld [vmem:[%s1 + $0x128] sm:$0xff]
    %v117 = vld [vmem:[%s1 + $0x130] sm:$0xff]
    %v118 = vld [vmem:[%s1 + $0x138] sm:$0xff]
    %v119 = vld [vmem:[%s1 + $0x140] sm:$0xff]
    %v120 = vld [vmem:[%s1 + $0x148] sm:$0xff]
    %v121 = vld [vmem:[%s1 + $0x150] sm:$0xff]
    %v122 = vld [vmem:[%s1 + $0x158] sm:$0xff]
    %v123 = vld [vmem:[%s1 + $0x160] sm:$0xff]
    %v124 = vld [vmem:[%s1 + $0x168] sm:$0xff]
    %v125 = vld [vmem:[%s1 + $0x170] sm:$0xff]
    %v126 = vld [vmem:[%s1 + $0x178] sm:$0xff]
    %v127 = vld [vmem:[%s1 + $0x180] sm:$0xff]
    %v128 = vld [vmem:[%s1 + $0x188] sm:$0xff]
    %v129 = vld [vmem:[%s1 + $0x190] sm:$0xff]
    %v130 = vld [vmem:[%s1 + $0x198] sm:$0xff]
    %v131 = vld [vmem:[%s1 + $0x1a0] sm:$0xff]
    %v132 = vld [vmem:[%s1 + $0x1a8] sm:$0xff]
    %v133 = vld [vmem:[%s1 + $0x1b0] sm:$0xff]
    %v134 = vld [vmem:[%s1 + $0x1b8] sm:$0xff]
    %v135 = vld [vmem:[%s1 + $0x1c0] sm:$0xff]
    %v136 = vld [vmem:[%s1 + $0x1c8] sm:$0xff]
    %v137 = vld [vmem:[%s1 + $0x1d0] sm:$0xff]
    %v138 = vld [vmem:[%s1 + $0x1d8] sm:$0xff]
    %v139 = vld [vmem:[%s1 + $0x1e0] sm:$0xff]
    %v140 = vld [vmem:[%s1 + $0x1e8] sm:$0xff]
    %v141 = vld [vmem:[%s1 + $0x1f0] sm:$0xff]
    %v142 = vld [vmem:[%s1 + $0x1f8] sm:$0xff]
    %v143 = vld [vmem:[%s1 + $0x200] sm:$0xff]
    %v144 = vld [vmem:[%s1 + $0x208] sm:$0xff]
    %v145 = vld [vmem:[%s1 + $0x210] sm:$0xff]
    %v146 = vld [vmem:[%s1 + $0x218] sm:$0xff]
    %v147 = vld [vmem:[%s1 + $0x220] sm:$0xff]
    %v148 = vld [vmem:[%s1 + $0x228] sm:$0xff]
    %v149 = vld [vmem:[%s1 + $0x230] sm:$0xff]
    %v150 = vld [vmem:[%s1 + $0x238] sm:$0xff]
    %v151 = vld [vmem:[%s1 + $0x240] sm:$0xff]
    %v152 = vld [vmem:[%s1 + $0x248] sm:$0xff]
    %v153 = vld [vmem:[%s1 + $0x250] sm:$0xff]
    %v154 = vld [vmem:[%s1 + $0x258] sm:$0xff]
    %v155 = vld [vmem:[%s1 + $0x260] sm:$0xff]
    %v156 = vld [vmem:[%s1 + $0x268] sm:$0xff]
    %v157 = vld [vmem:[%s1 + $0x270] sm:$0xff]
    %v158 = vld [vmem:[%s1 + $0x278] sm:$0xff]
    %v159 = vld [vmem:[%s1 + $0x280] sm:$0xff]
    %v160 = vld [vmem:[%s1 + $0x288] sm:$0xff]
    %v161 = vld [vmem:[%s1 + $0x290] sm:$0xff]
    %v162 = vld [vmem:[%s1 + $0x298] sm:$0xff]
    %v163 = vld [vmem:[%s1 + $0x2a0] sm:$0xff]
    %v164 = vld [vmem:[%s1 + $0x2a8] sm:$0xff]
    %v165 = vld [vmem:[%s1 + $0x2b0] sm:$0xff]
    %v166 = vld [vmem:[%s1 + $0x2b8] sm:$0xff]
    %v167 = vld [vmem:[%s1 + $0x2c0] sm:$0xff]
    %v168 = vld [vmem:[%s1 + $0x2c8] sm:$0xff]
    %v169 = vld [vmem:[%s1 + $0x2d0] sm:$0xff]
    %v170 = vld [vmem:[%s1 + $0x2d8] sm:$0xff]
    %v171 = vld [vmem:[%s1 + $0x2e0] sm:$0xff]
    %v172 = vld [vmem:[%s1 + $0x2e8] sm:$0xff]
    %v173 = vld [vmem:[%s1 + $0x2f0] sm:$0xff]
    %v174 = vld [vmem:[%s1 + $0x2f8] sm:$0xff]
    %v175 = vld [vmem:[%s1 + $0x300] sm:$0xff]
    %v176 = vld [vmem:[%s1 + $0x308] sm:$0xff]
    %v177 = vld [vmem:[%s2] sm:$0x3]
    %v178 = vpack.c.bf16 %v72, %v72
    %v179 = vpack.c.bf16 %v73, %v73
    %v180 = vpack.c.bf16 %v74, %v74
    %v181 = vpack.c.bf16 %v75, %v75
    %v182 = vpack.c.bf16 %v76, %v76
    %v183 = vpack.c.bf16 %v77, %v77
    %v184 = vpack.c.bf16 %v78, %v78
    %v186 = vlaneseq
    %v187 = vshrl.u32 %v186, 7
    %v188 = vsub.s32 0, %v187
    %v189 = vrot.slane %v177, %v188
    %v190 = vlaneseq
    %v191 = vshrl.u32 %v190, 7
    %v192 = vsub.s32 1, %v191
    %v193 = vrot.slane %v177, %v192
    %v294 = vunpack.c.l.b16 %v79
    %v295 = vunpack.c.h.b16 %v79
    %v296 = vunpack.c.l.b16 %v80
    %v297 = vunpack.c.h.b16 %v80
    %v298 = vunpack.c.l.b16 %v81
    %v299 = vunpack.c.h.b16 %v81
    %v300 = vunpack.c.l.b16 %v82
    %v301 = vunpack.c.h.b16 %v82
    %v302 = vunpack.c.l.b16 %v83
    %v303 = vunpack.c.h.b16 %v83
    %v304 = vunpack.c.l.b16 %v84
    %v305 = vunpack.c.h.b16 %v84
    %v306 = vunpack.c.l.b16 %v85
    %v307 = vunpack.c.h.b16 %v85
    %v308 = vunpack.c.l.b16 %v86
    %v309 = vunpack.c.h.b16 %v86
    %v310 = vunpack.c.l.b16 %v87
    %v311 = vunpack.c.h.b16 %v87
    %v312 = vunpack.c.l.b16 %v88
    %v313 = vunpack.c.h.b16 %v88
    %v314 = vunpack.c.l.b16 %v89
    %v315 = vunpack.c.h.b16 %v89
    %v316 = vunpack.c.l.b16 %v90
    %v317 = vunpack.c.h.b16 %v90
    %v318 = vunpack.c.l.b16 %v91
    %v319 = vunpack.c.h.b16 %v91
    %v320 = vunpack.c.l.b16 %v92
    %v321 = vunpack.c.h.b16 %v92
    %v322 = vunpack.c.l.b16 %v93
    %v323 = vunpack.c.h.b16 %v93
    %v324 = vunpack.c.l.b16 %v94
    %v325 = vunpack.c.h.b16 %v94
    %v326 = vunpack.c.l.b16 %v95
    %v327 = vunpack.c.h.b16 %v95
    %v328 = vunpack.c.l.b16 %v96
    %v329 = vunpack.c.h.b16 %v96
    %v330 = vunpack.c.l.b16 %v97
    %v331 = vunpack.c.h.b16 %v97
    %v332 = vunpack.c.l.b16 %v98
    %v333 = vunpack.c.h.b16 %v98
    %v334 = vunpack.c.l.b16 %v99
    %v335 = vunpack.c.h.b16 %v99
    %v336 = vunpack.c.l.b16 %v100
    %v337 = vunpack.c.h.b16 %v100
    %v338 = vunpack.c.l.b16 %v101
    %v339 = vunpack.c.h.b16 %v101
    %v340 = vunpack.c.l.b16 %v102
    %v341 = vunpack.c.h.b16 %v102
    %v342 = vunpack.c.l.b16 %v103
    %v343 = vunpack.c.h.b16 %v103
    %v344 = vunpack.c.l.b16 %v104
    %v345 = vunpack.c.h.b16 %v104
    %v346 = vunpack.c.l.b16 %v105
    %v347 = vunpack.c.h.b16 %v105
    %v348 = vunpack.c.l.b16 %v106
    %v349 = vunpack.c.h.b16 %v106
    %v350 = vunpack.c.l.b16 %v107
    %v351 = vunpack.c.h.b16 %v107
    %v352 = vunpack.c.l.b16 %v108
    %v353 = vunpack.c.h.b16 %v108
    %v354 = vunpack.c.l.b16 %v109
    %v355 = vunpack.c.h.b16 %v109
    %v356 = vunpack.c.l.b16 %v110
    %v357 = vunpack.c.h.b16 %v110
    %v358 = vunpack.c.l.b16 %v111
    %v359 = vunpack.c.h.b16 %v111
    %v360 = vunpack.c.l.b16 %v112
    %v361 = vunpack.c.h.b16 %v112
    %v362 = vunpack.c.l.b16 %v113
    %v363 = vunpack.c.h.b16 %v113
    %v364 = vunpack.c.l.b16 %v114
    %v365 = vunpack.c.h.b16 %v114
    %v366 = vunpack.c.l.b16 %v115
    %v367 = vunpack.c.h.b16 %v115
    %v368 = vunpack.c.l.b16 %v116
    %v369 = vunpack.c.h.b16 %v116
    %v370 = vunpack.c.l.b16 %v117
    %v371 = vunpack.c.h.b16 %v117
    %v372 = vunpack.c.l.b16 %v118
    %v373 = vunpack.c.h.b16 %v118
    %v374 = vunpack.c.l.b16 %v119
    %v375 = vunpack.c.h.b16 %v119
    %v376 = vunpack.c.l.b16 %v120
    %v377 = vunpack.c.h.b16 %v120
    %v378 = vunpack.c.l.b16 %v121
    %v379 = vunpack.c.h.b16 %v121
    %v380 = vunpack.c.l.b16 %v122
    %v381 = vunpack.c.h.b16 %v122
    %v382 = vunpack.c.l.b16 %v123
    %v383 = vunpack.c.h.b16 %v123
    %v384 = vunpack.c.l.b16 %v124
    %v385 = vunpack.c.h.b16 %v124
    %v386 = vunpack.c.l.b16 %v125
    %v387 = vunpack.c.h.b16 %v125
    %v388 = vunpack.c.l.b16 %v126
    %v389 = vunpack.c.h.b16 %v126
    %v390 = vunpack.c.l.b16 %v127
    %v391 = vunpack.c.h.b16 %v127
    %v392 = vunpack.c.l.b16 %v128
    %v393 = vunpack.c.h.b16 %v128
    %v394 = vunpack.c.l.b16 %v129
    %v395 = vunpack.c.h.b16 %v129
    %v396 = vunpack.c.l.b16 %v130
    %v397 = vunpack.c.h.b16 %v130
    %v398 = vunpack.c.l.b16 %v131
    %v399 = vunpack.c.h.b16 %v131
    %v400 = vunpack.c.l.b16 %v132
    %v401 = vunpack.c.h.b16 %v132
    %v402 = vunpack.c.l.b16 %v133
    %v403 = vunpack.c.h.b16 %v133
    %v404 = vunpack.c.l.b16 %v134
    %v405 = vunpack.c.h.b16 %v134
    %v406 = vunpack.c.l.b16 %v135
    %v407 = vunpack.c.h.b16 %v135
    %v408 = vunpack.c.l.b16 %v136
    %v409 = vunpack.c.h.b16 %v136
    %v410 = vunpack.c.l.b16 %v137
    %v411 = vunpack.c.h.b16 %v137
    %v412 = vunpack.c.l.b16 %v138
    %v413 = vunpack.c.h.b16 %v138
    %v414 = vunpack.c.l.b16 %v139
    %v415 = vunpack.c.h.b16 %v139
    %v416 = vunpack.c.l.b16 %v140
    %v417 = vunpack.c.h.b16 %v140
    %v418 = vunpack.c.l.b16 %v141
    %v419 = vunpack.c.h.b16 %v141
    %v420 = vunpack.c.l.b16 %v142
    %v421 = vunpack.c.h.b16 %v142
    %v422 = vunpack.c.l.b16 %v143
    %v423 = vunpack.c.h.b16 %v143
    %v424 = vunpack.c.l.b16 %v144
    %v425 = vunpack.c.h.b16 %v144
    %v426 = vunpack.c.l.b16 %v145
    %v427 = vunpack.c.h.b16 %v145
    %v428 = vunpack.c.l.b16 %v146
    %v429 = vunpack.c.h.b16 %v146
    %v430 = vunpack.c.l.b16 %v147
    %v431 = vunpack.c.h.b16 %v147
    %v432 = vunpack.c.l.b16 %v148
    %v433 = vunpack.c.h.b16 %v148
    %v434 = vunpack.c.l.b16 %v149
    %v435 = vunpack.c.h.b16 %v149
    %v436 = vunpack.c.l.b16 %v150
    %v437 = vunpack.c.h.b16 %v150
    %v438 = vunpack.c.l.b16 %v151
    %v439 = vunpack.c.h.b16 %v151
    %v440 = vunpack.c.l.b16 %v152
    %v441 = vunpack.c.h.b16 %v152
    %v442 = vunpack.c.l.b16 %v153
    %v443 = vunpack.c.h.b16 %v153
    %v444 = vunpack.c.l.b16 %v154
    %v445 = vunpack.c.h.b16 %v154
    %v446 = vunpack.c.l.b16 %v155
    %v447 = vunpack.c.h.b16 %v155
    %v448 = vunpack.c.l.b16 %v156
    %v449 = vunpack.c.h.b16 %v156
    %v450 = vunpack.c.l.b16 %v157
    %v451 = vunpack.c.h.b16 %v157
    %v452 = vunpack.c.l.b16 %v158
    %v453 = vunpack.c.h.b16 %v158
    %v454 = vunpack.c.l.b16 %v159
    %v455 = vunpack.c.h.b16 %v159
    %v456 = vunpack.c.l.b16 %v160
    %v457 = vunpack.c.h.b16 %v160
    %v458 = vunpack.c.l.b16 %v161
    %v459 = vunpack.c.h.b16 %v161
    %v460 = vunpack.c.l.b16 %v162
    %v461 = vunpack.c.h.b16 %v162
    %v462 = vunpack.c.l.b16 %v163
    %v463 = vunpack.c.h.b16 %v163
    %v464 = vunpack.c.l.b16 %v164
    %v465 = vunpack.c.h.b16 %v164
    %v466 = vunpack.c.l.b16 %v165
    %v467 = vunpack.c.h.b16 %v165
    %v468 = vunpack.c.l.b16 %v166
    %v469 = vunpack.c.h.b16 %v166
    %v470 = vunpack.c.l.b16 %v167
    %v471 = vunpack.c.h.b16 %v167
    %v472 = vunpack.c.l.b16 %v168
    %v473 = vunpack.c.h.b16 %v168
    %v474 = vunpack.c.l.b16 %v169
    %v475 = vunpack.c.h.b16 %v169
    %v476 = vunpack.c.l.b16 %v170
    %v477 = vunpack.c.h.b16 %v170
    %v478 = vunpack.c.l.b16 %v171
    %v479 = vunpack.c.h.b16 %v171
    %v480 = vunpack.c.l.b16 %v172
    %v481 = vunpack.c.h.b16 %v172
    %v482 = vunpack.c.l.b16 %v173
    %v483 = vunpack.c.h.b16 %v173
    %v484 = vunpack.c.l.b16 %v174
    %v485 = vunpack.c.h.b16 %v174
    %v486 = vunpack.c.l.b16 %v175
    %v487 = vunpack.c.h.b16 %v175
    %v488 = vunpack.c.l.b16 %v176
    %v489 = vunpack.c.h.b16 %v176
    %v490 = vpack.c.b16 %v296, %v294
    %v491 = vpack.c.b16 %v297, %v295
    %v492 = vpack.c.b16 %v300, %v298
    %v493 = vpack.c.b16 %v301, %v299
    %v494 = vpack.c.b16 %v304, %v302
    %v495 = vpack.c.b16 %v305, %v303
    %v496 = vpack.c.b16 %v308, %v306
    %v497 = vpack.c.b16 %v309, %v307
    %v498 = vpack.c.b16 %v312, %v310
    %v499 = vpack.c.b16 %v313, %v311
    %v500 = vpack.c.b16 %v316, %v314
    %v501 = vpack.c.b16 %v317, %v315
    %v502 = vpack.c.b16 %v320, %v318
    %v503 = vpack.c.b16 %v321, %v319
    %v504 = vpack.c.b16 %v324, %v322
    %v505 = vpack.c.b16 %v325, %v323
    %v506 = vpack.c.b16 %v328, %v326
    %v507 = vpack.c.b16 %v329, %v327
    %v508 = vpack.c.b16 %v332, %v330
    %v509 = vpack.c.b16 %v333, %v331
    %v510 = vpack.c.b16 %v336, %v334
    %v511 = vpack.c.b16 %v337, %v335
    %v512 = vpack.c.b16 %v340, %v338
    %v513 = vpack.c.b16 %v341, %v339
    %v514 = vpack.c.b16 %v344, %v342
    %v515 = vpack.c.b16 %v345, %v343
    %v516 = vpack.c.b16 %v348, %v346
    %v517 = vpack.c.b16 %v349, %v347
    %v518 = vpack.c.b16 %v352, %v350
    %v519 = vpack.c.b16 %v353, %v351
    %v520 = vpack.c.b16 %v356, %v354
    %v521 = vpack.c.b16 %v357, %v355
    %v522 = vpack.c.b16 %v360, %v358
    %v523 = vpack.c.b16 %v361, %v359
    %v524 = vpack.c.b16 %v364, %v362
    %v525 = vpack.c.b16 %v365, %v363
    %v526 = vpack.c.b16 %v368, %v366
    %v527 = vpack.c.b16 %v369, %v367
    %v528 = vpack.c.b16 %v372, %v370
    %v529 = vpack.c.b16 %v373, %v371
    %v530 = vpack.c.b16 %v376, %v374
    %v531 = vpack.c.b16 %v377, %v375
    %v532 = vpack.c.b16 %v380, %v378
    %v533 = vpack.c.b16 %v381, %v379
    %v534 = vpack.c.b16 %v384, %v382
    %v535 = vpack.c.b16 %v385, %v383
    %v536 = vpack.c.b16 %v388, %v386
    %v537 = vpack.c.b16 %v389, %v387
    %v538 = vpack.c.b16 %v392, %v390
    %v539 = vpack.c.b16 %v393, %v391
    %v540 = vpack.c.b16 %v396, %v394
    %v541 = vpack.c.b16 %v397, %v395
    %v542 = vpack.c.b16 %v400, %v398
    %v543 = vpack.c.b16 %v401, %v399
    %v544 = vpack.c.b16 %v404, %v402
    %v545 = vpack.c.b16 %v405, %v403
    %v546 = vpack.c.b16 %v408, %v406
    %v547 = vpack.c.b16 %v409, %v407
    %v548 = vpack.c.b16 %v412, %v410
    %v549 = vpack.c.b16 %v413, %v411
    %v550 = vpack.c.b16 %v416, %v414
    %v551 = vpack.c.b16 %v417, %v415
    %v552 = vpack.c.b16 %v420, %v418
    %v553 = vpack.c.b16 %v421, %v419
    %v554 = vpack.c.b16 %v424, %v422
    %v555 = vpack.c.b16 %v425, %v423
    %v556 = vpack.c.b16 %v428, %v426
    %v557 = vpack.c.b16 %v429, %v427
    %v558 = vpack.c.b16 %v432, %v430
    %v559 = vpack.c.b16 %v433, %v431
    %v560 = vpack.c.b16 %v436, %v434
    %v561 = vpack.c.b16 %v437, %v435
    %v562 = vpack.c.b16 %v440, %v438
    %v563 = vpack.c.b16 %v441, %v439
    %v564 = vpack.c.b16 %v444, %v442
    %v565 = vpack.c.b16 %v445, %v443
    %v566 = vpack.c.b16 %v448, %v446
    %v567 = vpack.c.b16 %v449, %v447
    %v568 = vpack.c.b16 %v452, %v450
    %v569 = vpack.c.b16 %v453, %v451
    %v570 = vpack.c.b16 %v456, %v454
    %v571 = vpack.c.b16 %v457, %v455
    %v572 = vpack.c.b16 %v460, %v458
    %v573 = vpack.c.b16 %v461, %v459
    %v574 = vpack.c.b16 %v464, %v462
    %v575 = vpack.c.b16 %v465, %v463
    %v576 = vpack.c.b16 %v468, %v466
    %v577 = vpack.c.b16 %v469, %v467
    %v578 = vpack.c.b16 %v472, %v470
    %v579 = vpack.c.b16 %v473, %v471
    %v580 = vpack.c.b16 %v476, %v474
    %v581 = vpack.c.b16 %v477, %v475
    %v582 = vpack.c.b16 %v480, %v478
    %v583 = vpack.c.b16 %v481, %v479
    %v584 = vpack.c.b16 %v484, %v482
    %v585 = vpack.c.b16 %v485, %v483
    %v586 = vpack.c.b16 %v488, %v486
    %v587 = vpack.c.b16 %v489, %v487
    %vm686 = vcmask 130048
    %v688 = vsel %vm686, %v184, 0
    %690 = vmatprep.subr.bf16.mxu0 %v491
    %691 = vmatpush1.bf16.msra.mxu0 %v490
    %692 = vmatprep.subr.bf16.mxu0 %v493
    %693 = vmatpush1.bf16.msra.mxu0 %v492
    %694 = vmatprep.subr.bf16.mxu0 %v495
    %695 = vmatpush1.bf16.msra.mxu0 %v494
    %696 = vmatprep.subr.bf16.mxu0 %v497
    %697 = vmatpush1.bf16.msra.mxu0 %v496
    %698 = vmatprep.subr.bf16.mxu0 %v499
    %699 = vmatpush1.bf16.msra.mxu0 %v498
    %700 = vmatprep.subr.bf16.mxu0 %v501
    %701 = vmatpush1.bf16.msra.mxu0 %v500
    %702 = vmatprep.subr.bf16.mxu0 %v503
    %703 = vmatpush1.bf16.msra.mxu0 %v502
    %704 = vmatprep.subr.bf16.mxu0 %v505
    %705 = vmatpush1.bf16.msra.mxu0 %v504
    %706 = vmatprep.subr.bf16.mxu0 %v507
    %707 = vmatpush1.bf16.msra.mxu0 %v506
    %708 = vmatprep.subr.bf16.mxu0 %v509
    %709 = vmatpush1.bf16.msra.mxu0 %v508
    %710 = vmatprep.subr.bf16.mxu0 %v511
    %711 = vmatpush1.bf16.msra.mxu0 %v510
    %712 = vmatprep.subr.bf16.mxu0 %v513
    %713 = vmatpush1.bf16.msra.mxu0 %v512
    %714 = vmatprep.subr.bf16.mxu0 %v515
    %715 = vmatpush1.bf16.msra.mxu0 %v514
    %716 = vmatprep.subr.bf16.mxu0 %v517
    %717 = vmatpush1.bf16.msra.mxu0 %v516
    %718 = vmatprep.subr.bf16.mxu0 %v519
    %719 = vmatpush1.bf16.msra.mxu0 %v518
    %720 = vmatprep.subr.bf16.mxu0 %v521
    %721 = vmatpush1.bf16.msra.mxu0 %v520
    %722 = vmatprep.mubr.bf16.mxu0 %v179
    %723 = vmatmul.mubr.bf16.gmra.mrb[0].mxu0 %v178
    %v724 = vpop.f32.mrb[0].mxu0
    %v725 = vadd.f32 %v189, %v724
    %v726 = vpop.f32.mrb[0].mxu0
    %v727 = vadd.f32 %v193, %v726
    %v728 = vpop.f32.mrb[0].mxu0
    %v729 = vpop.f32.mrb[0].mxu0
    %730 = vdwg.mxu0
    %731 = vmatprep.subr.bf16.mxu0 %v523
    %732 = vmatpush1.bf16.msra.mxu0 %v522
    %733 = vmatprep.subr.bf16.mxu0 %v525
    %734 = vmatpush1.bf16.msra.mxu0 %v524
    %735 = vmatprep.subr.bf16.mxu0 %v527
    %736 = vmatpush1.bf16.msra.mxu0 %v526
    %737 = vmatprep.subr.bf16.mxu0 %v529
    %738 = vmatpush1.bf16.msra.mxu0 %v528
    %739 = vmatprep.subr.bf16.mxu0 %v531
    %740 = vmatpush1.bf16.msra.mxu0 %v530
    %741 = vmatprep.subr.bf16.mxu0 %v533
    %742 = vmatpush1.bf16.msra.mxu0 %v532
    %743 = vmatprep.subr.bf16.mxu0 %v535
    %744 = vmatpush1.bf16.msra.mxu0 %v534
    %745 = vmatprep.subr.bf16.mxu0 %v537
    %746 = vmatpush1.bf16.msra.mxu0 %v536
    %747 = vmatprep.subr.bf16.mxu0 %v539
    %748 = vmatpush1.bf16.msra.mxu0 %v538
    %749 = vmatprep.subr.bf16.mxu0 %v541
    %750 = vmatpush1.bf16.msra.mxu0 %v540
    %751 = vmatprep.subr.bf16.mxu0 %v543
    %752 = vmatpush1.bf16.msra.mxu0 %v542
    %753 = vmatprep.subr.bf16.mxu0 %v545
    %754 = vmatpush1.bf16.msra.mxu0 %v544
    %755 = vmatprep.subr.bf16.mxu0 %v547
    %756 = vmatpush1.bf16.msra.mxu0 %v546
    %757 = vmatprep.subr.bf16.mxu0 %v549
    %758 = vmatpush1.bf16.msra.mxu0 %v548
    %759 = vmatprep.subr.bf16.mxu0 %v551
    %760 = vmatpush1.bf16.msra.mxu0 %v550
    %761 = vmatprep.subr.bf16.mxu0 %v553
    %762 = vmatpush1.bf16.msra.mxu0 %v552
    %763 = vmatprep.mubr.bf16.mxu0 %v181
    %764 = vmatmul.mubr.bf16.gmra.mrb[0].mxu0 %v180
    %v765 = vpop.f32.mrb[0].mxu0
    %v766 = vadd.f32 %v725, %v765
    %v767 = vpop.f32.mrb[0].mxu0
    %v768 = vadd.f32 %v727, %v767
    %v769 = vpop.f32.mrb[0].mxu0
    %v770 = vpop.f32.mrb[0].mxu0
    %771 = vdwg.mxu0
    %772 = vmatprep.subr.bf16.mxu0 %v555
    %773 = vmatpush1.bf16.msra.mxu0 %v554
    %774 = vmatprep.subr.bf16.mxu0 %v557
    %775 = vmatpush1.bf16.msra.mxu0 %v556
    %776 = vmatprep.subr.bf16.mxu0 %v559
    %777 = vmatpush1.bf16.msra.mxu0 %v558
    %778 = vmatprep.subr.bf16.mxu0 %v561
    %779 = vmatpush1.bf16.msra.mxu0 %v560
    %780 = vmatprep.subr.bf16.mxu0 %v563
    %781 = vmatpush1.bf16.msra.mxu0 %v562
    %782 = vmatprep.subr.bf16.mxu0 %v565
    %783 = vmatpush1.bf16.msra.mxu0 %v564
    %784 = vmatprep.subr.bf16.mxu0 %v567
    %785 = vmatpush1.bf16.msra.mxu0 %v566
    %786 = vmatprep.subr.bf16.mxu0 %v569
    %787 = vmatpush1.bf16.msra.mxu0 %v568
    %788 = vmatprep.subr.bf16.mxu0 %v571
    %789 = vmatpush1.bf16.msra.mxu0 %v570
    %790 = vmatprep.subr.bf16.mxu0 %v573
    %791 = vmatpush1.bf16.msra.mxu0 %v572
    %792 = vmatprep.subr.bf16.mxu0 %v575
    %793 = vmatpush1.bf16.msra.mxu0 %v574
    %794 = vmatprep.subr.bf16.mxu0 %v577
    %795 = vmatpush1.bf16.msra.mxu0 %v576
    %796 = vmatprep.subr.bf16.mxu0 %v579
    %797 = vmatpush1.bf16.msra.mxu0 %v578
    %798 = vmatprep.subr.bf16.mxu0 %v581
    %799 = vmatpush1.bf16.msra.mxu0 %v580
    %800 = vmatprep.subr.bf16.mxu0 %v583
    %801 = vmatpush1.bf16.msra.mxu0 %v582
    %802 = vmatprep.subr.bf16.mxu0 %v585
    %803 = vmatpush1.bf16.msra.mxu0 %v584
    %804 = vmatprep.mubr.bf16.mxu0 %v183
    %805 = vmatmul.mubr.bf16.gmra.mrb[0].mxu0 %v182
    %v806 = vpop.f32.mrb[0].mxu0
    %v807 = vadd.f32 %v766, %v806
    %v808 = vpop.f32.mrb[0].mxu0
    %v809 = vadd.f32 %v768, %v808
    %v810 = vpop.f32.mrb[0].mxu0
    %v811 = vpop.f32.mrb[0].mxu0
    %812 = vdwg.mxu0
    %813 = vmatprep.subr.bf16.mxu0 %v587
    %814 = vmatpush1.bf16.msra.mxu0 %v586
    %815 = vmatprep.subr.bf16.mxu0 0
    %816 = vmatpush1.bf16.msra.mxu0 0
    %817 = vmatprep.subr.bf16.mxu0 0
    %818 = vmatpush1.bf16.msra.mxu0 0
    %819 = vmatprep.subr.bf16.mxu0 0
    %820 = vmatpush1.bf16.msra.mxu0 0
    %821 = vmatprep.subr.bf16.mxu0 0
    %822 = vmatpush1.bf16.msra.mxu0 0
    %823 = vmatprep.subr.bf16.mxu0 0
    %824 = vmatpush1.bf16.msra.mxu0 0
    %825 = vmatprep.subr.bf16.mxu0 0
    %826 = vmatpush1.bf16.msra.mxu0 0
    %827 = vmatprep.subr.bf16.mxu0 0
    %828 = vmatpush1.bf16.msra.mxu0 0
    %829 = vmatprep.subr.bf16.mxu0 0
    %830 = vmatpush1.bf16.msra.mxu0 0
    %831 = vmatprep.subr.bf16.mxu0 0
    %832 = vmatpush1.bf16.msra.mxu0 0
    %833 = vmatprep.subr.bf16.mxu0 0
    %834 = vmatpush1.bf16.msra.mxu0 0
    %835 = vmatprep.subr.bf16.mxu0 0
    %836 = vmatpush1.bf16.msra.mxu0 0
    %837 = vmatprep.subr.bf16.mxu0 0
    %838 = vmatpush1.bf16.msra.mxu0 0
    %839 = vmatprep.subr.bf16.mxu0 0
    %840 = vmatpush1.bf16.msra.mxu0 0
    %841 = vmatprep.subr.bf16.mxu0 0
    %842 = vmatpush1.bf16.msra.mxu0 0
    %843 = vmatprep.subr.bf16.mxu0 0
    %844 = vmatpush1.bf16.msra.mxu0 0
    %845 = vmatprep.mubr.bf16.mxu0 0
    %846 = vmatmul.mubr.bf16.gmra.mrb[0].mxu0 %v688
    %v847 = vpop.f32.mrb[0].mxu0
    %v848 = vadd.f32 %v807, %v847
    %v849 = vpop.f32.mrb[0].mxu0
    %v850 = vadd.f32 %v809, %v849
    %v851 = vpop.f32.mrb[0].mxu0
    %v852 = vpop.f32.mrb[0].mxu0
    %853 = vdwg.mxu0
    %v854 = vtanh.pop %v848
    %v855 = vtanh.pop %v850
    %v856 = vld [vmem:[%s3] sm:$0xf]
    %v857 = vld [vmem:[%s3 + $0x4] sm:$0xf]
    %v858 = vld [vmem:[%s3 + $0x8] sm:$0xf]
    %v859 = vld [vmem:[%s3 + $0xc] sm:$0xf]
    %v860 = vld [vmem:[%s3 + $0x10] sm:$0xf]
    %v861 = vld [vmem:[%s3 + $0x14] sm:$0xf]
    %v862 = vld [vmem:[%s3 + $0x18] sm:$0xf]
    %v863 = vld [vmem:[%s3 + $0x1c] sm:$0xf]
    %v864 = vld [vmem:[%s3 + $0x20] sm:$0xf]
    %v865 = vld [vmem:[%s3 + $0x24] sm:$0xf]
    %v866 = vld [vmem:[%s3 + $0x28] sm:$0xf]
    %v867 = vld [vmem:[%s3 + $0x2c] sm:$0xf]
    %v868 = vld [vmem:[%s3 + $0x30] sm:$0xf]
    %v869 = vld [vmem:[%s3 + $0x34] sm:$0xf]
    %v870 = vld [vmem:[%s3 + $0x38] sm:$0xf]
    %v871 = vld [vmem:[%s3 + $0x3c] sm:$0xf]
    %v872 = vld [vmem:[%s3 + $0x40] sm:$0xf]
    %v873 = vld [vmem:[%s3 + $0x44] sm:$0xf]
    %v874 = vld [vmem:[%s3 + $0x48] sm:$0xf]
    %v875 = vld [vmem:[%s3 + $0x4c] sm:$0xf]
    %v876 = vld [vmem:[%s3 + $0x50] sm:$0xf]
    %v877 = vld [vmem:[%s3 + $0x54] sm:$0xf]
    %v878 = vld [vmem:[%s3 + $0x58] sm:$0xf]
    %v879 = vld [vmem:[%s3 + $0x5c] sm:$0xf]
    %v880 = vld [vmem:[%s3 + $0x60] sm:$0xf]
    %v881 = vld [vmem:[%s3 + $0x64] sm:$0xf]
    %v882 = vld [vmem:[%s3 + $0x68] sm:$0xf]
    %v883 = vld [vmem:[%s3 + $0x6c] sm:$0xf]
    %v884 = vld [vmem:[%s3 + $0x70] sm:$0xf]
    %v885 = vld [vmem:[%s3 + $0x74] sm:$0xf]
    %v886 = vld [vmem:[%s3 + $0x78] sm:$0xf]
    %v887 = vld [vmem:[%s3 + $0x7c] sm:$0xf]
    %v888 = vld [vmem:[%s4] sm:$0x1]
    %v889 = vpack.c.bf16 %v854, %v854
    %v890 = vpack.c.bf16 %v855, %v855
    %v892 = vlaneseq
    %v893 = vshrl.u32 %v892, 7
    %v894 = vsub.s32 0, %v893
    %v895 = vrot.slane %v888, %v894
    %v929 = vunpack.c.l.b16 %v856
    %v930 = vunpack.c.l.b16 %v857
    %v931 = vunpack.c.l.b16 %v858
    %v932 = vunpack.c.l.b16 %v859
    %v933 = vunpack.c.l.b16 %v860
    %v934 = vunpack.c.l.b16 %v861
    %v935 = vunpack.c.l.b16 %v862
    %v936 = vunpack.c.l.b16 %v863
    %v937 = vunpack.c.l.b16 %v864
    %v938 = vunpack.c.l.b16 %v865
    %v939 = vunpack.c.l.b16 %v866
    %v940 = vunpack.c.l.b16 %v867
    %v941 = vunpack.c.l.b16 %v868
    %v942 = vunpack.c.l.b16 %v869
    %v943 = vunpack.c.l.b16 %v870
    %v944 = vunpack.c.l.b16 %v871
    %v945 = vunpack.c.l.b16 %v872
    %v946 = vunpack.c.l.b16 %v873
    %v947 = vunpack.c.l.b16 %v874
    %v948 = vunpack.c.l.b16 %v875
    %v949 = vunpack.c.l.b16 %v876
    %v950 = vunpack.c.l.b16 %v877
    %v951 = vunpack.c.l.b16 %v878
    %v952 = vunpack.c.l.b16 %v879
    %v953 = vunpack.c.l.b16 %v880
    %v954 = vunpack.c.l.b16 %v881
    %v955 = vunpack.c.l.b16 %v882
    %v956 = vunpack.c.l.b16 %v883
    %v957 = vunpack.c.l.b16 %v884
    %v958 = vunpack.c.l.b16 %v885
    %v959 = vunpack.c.l.b16 %v886
    %v960 = vunpack.c.l.b16 %v887
    %v961 = vpack.c.b16 %v930, %v929
    %v962 = vpack.c.b16 %v932, %v931
    %v963 = vpack.c.b16 %v934, %v933
    %v964 = vpack.c.b16 %v936, %v935
    %v965 = vpack.c.b16 %v938, %v937
    %v966 = vpack.c.b16 %v940, %v939
    %v967 = vpack.c.b16 %v942, %v941
    %v968 = vpack.c.b16 %v944, %v943
    %v969 = vpack.c.b16 %v946, %v945
    %v970 = vpack.c.b16 %v948, %v947
    %v971 = vpack.c.b16 %v950, %v949
    %v972 = vpack.c.b16 %v952, %v951
    %v973 = vpack.c.b16 %v954, %v953
    %v974 = vpack.c.b16 %v956, %v955
    %v975 = vpack.c.b16 %v958, %v957
    %v976 = vpack.c.b16 %v960, %v959
    %993 = vmatprep.subr.bf16.mxu0 0
    %994 = vmatpush1.bf16.msra.mxu0 %v961
    %995 = vmatprep.subr.bf16.mxu0 0
    %996 = vmatpush1.bf16.msra.mxu0 %v962
    %997 = vmatprep.subr.bf16.mxu0 0
    %998 = vmatpush1.bf16.msra.mxu0 %v963
    %999 = vmatprep.subr.bf16.mxu0 0
    %1000 = vmatpush1.bf16.msra.mxu0 %v964
    %1001 = vmatprep.subr.bf16.mxu0 0
    %1002 = vmatpush1.bf16.msra.mxu0 %v965
    %1003 = vmatprep.subr.bf16.mxu0 0
    %1004 = vmatpush1.bf16.msra.mxu0 %v966
    %1005 = vmatprep.subr.bf16.mxu0 0
    %1006 = vmatpush1.bf16.msra.mxu0 %v967
    %1007 = vmatprep.subr.bf16.mxu0 0
    %1008 = vmatpush1.bf16.msra.mxu0 %v968
    %1009 = vmatprep.subr.bf16.mxu0 0
    %1010 = vmatpush1.bf16.msra.mxu0 %v969
    %1011 = vmatprep.subr.bf16.mxu0 0
    %1012 = vmatpush1.bf16.msra.mxu0 %v970
    %1013 = vmatprep.subr.bf16.mxu0 0
    %1014 = vmatpush1.bf16.msra.mxu0 %v971
    %1015 = vmatprep.subr.bf16.mxu0 0
    %1016 = vmatpush1.bf16.msra.mxu0 %v972
    %1017 = vmatprep.subr.bf16.mxu0 0
    %1018 = vmatpush1.bf16.msra.mxu0 %v973
    %1019 = vmatprep.subr.bf16.mxu0 0
    %1020 = vmatpush1.bf16.msra.mxu0 %v974
    %1021 = vmatprep.subr.bf16.mxu0 0
    %1022 = vmatpush1.bf16.msra.mxu0 %v975
    %1023 = vmatprep.subr.bf16.mxu0 0
    %1024 = vmatpush1.bf16.msra.mxu0 %v976
    %1025 = vmatprep.mubr.bf16.mxu0 %v890
    %1026 = vmatmul.mubr.bf16.gmra.mrb[0].mxu0 %v889
    %v1027 = vpop.f32.mrb[0].mxu0
    %v1028 = vadd.f32 %v895, %v1027
    %v1029 = vpop.f32.mrb[0].mxu0
    %v1030 = vpop.f32.mrb[0].mxu0
    %v1031 = vpop.f32.mrb[0].mxu0
    %1032 = vdwg.mxu0
    %v1033 = vtanh.pop %v1028
    %v1034 = vld [vmem:[%s5] sm:$0xf]
    %v1035 = vld [vmem:[%s5 + $0x4] sm:$0xf]
    %v1036 = vld [vmem:[%s5 + $0x8] sm:$0xf]
    %v1037 = vld [vmem:[%s5 + $0xc] sm:$0xf]
    %v1038 = vld [vmem:[%s5 + $0x10] sm:$0xf]
    %v1039 = vld [vmem:[%s5 + $0x14] sm:$0xf]
    %v1040 = vld [vmem:[%s5 + $0x18] sm:$0xf]
    %v1041 = vld [vmem:[%s5 + $0x1c] sm:$0xf]
    %v1042 = vld [vmem:[%s5 + $0x20] sm:$0xf]
    %v1043 = vld [vmem:[%s5 + $0x24] sm:$0xf]
    %v1044 = vld [vmem:[%s5 + $0x28] sm:$0xf]
    %v1045 = vld [vmem:[%s5 + $0x2c] sm:$0xf]
    %v1046 = vld [vmem:[%s5 + $0x30] sm:$0xf]
    %v1047 = vld [vmem:[%s5 + $0x34] sm:$0xf]
    %v1048 = vld [vmem:[%s5 + $0x38] sm:$0xf]
    %v1049 = vld [vmem:[%s5 + $0x3c] sm:$0xf]
    %v1050 = vld [vmem:[%s6] sm:$0x1]
    %v1051 = vpack.c.bf16 %v1033, %v1033
    %v1053 = vlaneseq
    %v1054 = vshrl.u32 %v1053, 7
    %v1055 = vsub.s32 0, %v1054
    %v1056 = vrot.slane %v1050, %v1055
    %v1074 = vunpack.c.l.b16 %v1034
    %v1075 = vunpack.c.l.b16 %v1035
    %v1076 = vunpack.c.l.b16 %v1036
    %v1077 = vunpack.c.l.b16 %v1037
    %v1078 = vunpack.c.l.b16 %v1038
    %v1079 = vunpack.c.l.b16 %v1039
    %v1080 = vunpack.c.l.b16 %v1040
    %v1081 = vunpack.c.l.b16 %v1041
    %v1082 = vunpack.c.l.b16 %v1042
    %v1083 = vunpack.c.l.b16 %v1043
    %v1084 = vunpack.c.l.b16 %v1044
    %v1085 = vunpack.c.l.b16 %v1045
    %v1086 = vunpack.c.l.b16 %v1046
    %v1087 = vunpack.c.l.b16 %v1047
    %v1088 = vunpack.c.l.b16 %v1048
    %v1089 = vunpack.c.l.b16 %v1049
    %v1090 = vpack.c.b16 %v1075, %v1074
    %v1091 = vpack.c.b16 %v1077, %v1076
    %v1092 = vpack.c.b16 %v1079, %v1078
    %v1093 = vpack.c.b16 %v1081, %v1080
    %v1094 = vpack.c.b16 %v1083, %v1082
    %v1095 = vpack.c.b16 %v1085, %v1084
    %v1096 = vpack.c.b16 %v1087, %v1086
    %v1097 = vpack.c.b16 %v1089, %v1088
    %1106 = vmatprep.subr.bf16.mxu0 0
    %1107 = vmatpush1.bf16.msra.mxu0 %v1090
    %1108 = vmatprep.subr.bf16.mxu0 0
    %1109 = vmatpush1.bf16.msra.mxu0 %v1091
    %1110 = vmatprep.subr.bf16.mxu0 0
    %1111 = vmatpush1.bf16.msra.mxu0 %v1092
    %1112 = vmatprep.subr.bf16.mxu0 0
    %1113 = vmatpush1.bf16.msra.mxu0 %v1093
    %1114 = vmatprep.subr.bf16.mxu0 0
    %1115 = vmatpush1.bf16.msra.mxu0 %v1094
    %1116 = vmatprep.subr.bf16.mxu0 0
    %1117 = vmatpush1.bf16.msra.mxu0 %v1095
    %1118 = vmatprep.subr.bf16.mxu0 0
    %1119 = vmatpush1.bf16.msra.mxu0 %v1096
    %1120 = vmatprep.subr.bf16.mxu0 0
    %1121 = vmatpush1.bf16.msra.mxu0 %v1097
    %1122 = vmatprep.subr.bf16.mxu0 0
    %1123 = vmatpush1.bf16.msra.mxu0 0
    %1124 = vmatprep.subr.bf16.mxu0 0
    %1125 = vmatpush1.bf16.msra.mxu0 0
    %1126 = vmatprep.subr.bf16.mxu0 0
    %1127 = vmatpush1.bf16.msra.mxu0 0
    %1128 = vmatprep.subr.bf16.mxu0 0
    %1129 = vmatpush1.bf16.msra.mxu0 0
    %1130 = vmatprep.subr.bf16.mxu0 0
    %1131 = vmatpush1.bf16.msra.mxu0 0
    %1132 = vmatprep.subr.bf16.mxu0 0
    %1133 = vmatpush1.bf16.msra.mxu0 0
    %1134 = vmatprep.subr.bf16.mxu0 0
    %1135 = vmatpush1.bf16.msra.mxu0 0
    %1136 = vmatprep.subr.bf16.mxu0 0
    %1137 = vmatpush1.bf16.msra.mxu0 0
    %1138 = vmatprep.mubr.bf16.mxu0 0
    %1139 = vmatmul.mubr.bf16.gmra.mrb[0].mxu0 %v1051
    %v1140 = vpop.f32.mrb[0].mxu0
    %v1141 = vadd.f32 %v1056, %v1140
    %v1142 = vpop.f32.mrb[0].mxu0
    %v1143 = vpop.f32.mrb[0].mxu0
    %v1144 = vpop.f32.mrb[0].mxu0
    %1145 = vdwg.mxu0
    %v1146 = vtanh.pop %v1141
    %v1147 = vld [vmem:[%s7] sm:$0xf]
    %v1148 = vld [vmem:[%s7 + $0x4] sm:$0xf]
    %v1149 = vld [vmem:[%s7 + $0x8] sm:$0xf]
    %v1150 = vld [vmem:[%s7 + $0xc] sm:$0xf]
    %v1151 = vld [vmem:[%s7 + $0x10] sm:$0xf]
    %v1152 = vld [vmem:[%s7 + $0x14] sm:$0xf]
    %v1153 = vld [vmem:[%s7 + $0x18] sm:$0xf]
    %v1154 = vld [vmem:[%s7 + $0x1c] sm:$0xf]
    %v1155 = vld [vmem:[%s7 + $0x20] sm:$0xf]
    %v1156 = vld [vmem:[%s7 + $0x24] sm:$0xf]
    %v1157 = vld [vmem:[%s7 + $0x28] sm:$0xf]
    %v1158 = vld [vmem:[%s7 + $0x2c] sm:$0xf]
    %v1159 = vld [vmem:[%s7 + $0x30] sm:$0xf]
    %v1160 = vld [vmem:[%s7 + $0x34] sm:$0xf]
    %v1161 = vld [vmem:[%s7 + $0x38] sm:$0xf]
    %v1162 = vld [vmem:[%s7 + $0x3c] sm:$0xf]
    %v1163 = vld [vmem:[%s8] sm:$0x1]
    %v1164 = vpack.c.bf16 %v1146, %v1146
    %v1166 = vlaneseq
    %v1167 = vshrl.u32 %v1166, 7
    %v1168 = vsub.s32 0, %v1167
    %v1169 = vrot.slane %v1163, %v1168
    %v1187 = vunpack.c.l.b16 %v1147
    %v1188 = vunpack.c.l.b16 %v1148
    %v1189 = vunpack.c.l.b16 %v1149
    %v1190 = vunpack.c.l.b16 %v1150
    %v1191 = vunpack.c.l.b16 %v1151
    %v1192 = vunpack.c.l.b16 %v1152
    %v1193 = vunpack.c.l.b16 %v1153
    %v1194 = vunpack.c.l.b16 %v1154
    %v1195 = vunpack.c.l.b16 %v1155
    %v1196 = vunpack.c.l.b16 %v1156
    %v1197 = vunpack.c.l.b16 %v1157
    %v1198 = vunpack.c.l.b16 %v1158
    %v1199 = vunpack.c.l.b16 %v1159
    %v1200 = vunpack.c.l.b16 %v1160
    %v1201 = vunpack.c.l.b16 %v1161
    %v1202 = vunpack.c.l.b16 %v1162
    %v1203 = vpack.c.b16 %v1188, %v1187
    %v1204 = vpack.c.b16 %v1190, %v1189
    %v1205 = vpack.c.b16 %v1192, %v1191
    %v1206 = vpack.c.b16 %v1194, %v1193
    %v1207 = vpack.c.b16 %v1196, %v1195
    %v1208 = vpack.c.b16 %v1198, %v1197
    %v1209 = vpack.c.b16 %v1200, %v1199
    %v1210 = vpack.c.b16 %v1202, %v1201
    %1219 = vmatprep.subr.bf16.mxu0 0
    %1220 = vmatpush1.bf16.msra.mxu0 %v1203
    %1221 = vmatprep.subr.bf16.mxu0 0
    %1222 = vmatpush1.bf16.msra.mxu0 %v1204
    %1223 = vmatprep.subr.bf16.mxu0 0
    %1224 = vmatpush1.bf16.msra.mxu0 %v1205
    %1225 = vmatprep.subr.bf16.mxu0 0
    %1226 = vmatpush1.bf16.msra.mxu0 %v1206
    %1227 = vmatprep.subr.bf16.mxu0 0
    %1228 = vmatpush1.bf16.msra.mxu0 %v1207
    %1229 = vmatprep.subr.bf16.mxu0 0
    %1230 = vmatpush1.bf16.msra.mxu0 %v1208
    %1231 = vmatprep.subr.bf16.mxu0 0
    %1232 = vmatpush1.bf16.msra.mxu0 %v1209
    %1233 = vmatprep.subr.bf16.mxu0 0
    %1234 = vmatpush1.bf16.msra.mxu0 %v1210
    %1235 = vmatprep.subr.bf16.mxu0 0
    %1236 = vmatpush1.bf16.msra.mxu0 0
    %1237 = vmatprep.subr.bf16.mxu0 0
    %1238 = vmatpush1.bf16.msra.mxu0 0
    %1239 = vmatprep.subr.bf16.mxu0 0
    %1240 = vmatpush1.bf16.msra.mxu0 0
    %1241 = vmatprep.subr.bf16.mxu0 0
    %1242 = vmatpush1.bf16.msra.mxu0 0
    %1243 = vmatprep.subr.bf16.mxu0 0
    %1244 = vmatpush1.bf16.msra.mxu0 0
    %1245 = vmatprep.subr.bf16.mxu0 0
    %1246 = vmatpush1.bf16.msra.mxu0 0
    %1247 = vmatprep.subr.bf16.mxu0 0
    %1248 = vmatpush1.bf16.msra.mxu0 0
    %1249 = vmatprep.subr.bf16.mxu0 0
    %1250 = vmatpush1.bf16.msra.mxu0 0
    %1251 = vmatprep.mubr.bf16.mxu0 0
    %1252 = vmatmul.mubr.bf16.gmra.mrb[0].mxu0 %v1164
    %v1253 = vpop.f32.mrb[0].mxu0
    %v1254 = vadd.f32 %v1169, %v1253
    %v1255 = vpop.f32.mrb[0].mxu0
    %v1256 = vpop.f32.mrb[0].mxu0
    %v1257 = vpop.f32.mrb[0].mxu0
    %1258 = vdwg.mxu0
    %v1259 = vtanh.pop %v1254
    %v1260 = vld [vmem:[%s9] sm:$0xf]
    %v1261 = vld [vmem:[%s9 + $0x4] sm:$0xf]
    %v1262 = vld [vmem:[%s9 + $0x8] sm:$0xf]
    %v1263 = vld [vmem:[%s9 + $0xc] sm:$0xf]
    %v1264 = vld [vmem:[%s9 + $0x10] sm:$0xf]
    %v1265 = vld [vmem:[%s9 + $0x14] sm:$0xf]
    %v1266 = vld [vmem:[%s9 + $0x18] sm:$0xf]
    %v1267 = vld [vmem:[%s9 + $0x1c] sm:$0xf]
    %v1268 = vld [vmem:[%s9 + $0x20] sm:$0xf]
    %v1269 = vld [vmem:[%s9 + $0x24] sm:$0xf]
    %v1270 = vld [vmem:[%s9 + $0x28] sm:$0xf]
    %v1271 = vld [vmem:[%s9 + $0x2c] sm:$0xf]
    %v1272 = vld [vmem:[%s9 + $0x30] sm:$0xf]
    %v1273 = vld [vmem:[%s9 + $0x34] sm:$0xf]
    %v1274 = vld [vmem:[%s9 + $0x38] sm:$0xf]
    %v1275 = vld [vmem:[%s9 + $0x3c] sm:$0xf]
    %v1276 = vld [vmem:[%s10] sm:$0x1]
    %v1277 = vpack.c.bf16 %v1259, %v1259
    %v1279 = vlaneseq
    %v1280 = vshrl.u32 %v1279, 7
    %v1281 = vsub.s32 0, %v1280
    %v1282 = vrot.slane %v1276, %v1281
    %v1300 = vunpack.c.l.b16 %v1260
    %v1301 = vunpack.c.l.b16 %v1261
    %v1302 = vunpack.c.l.b16 %v1262
    %v1303 = vunpack.c.l.b16 %v1263
    %v1304 = vunpack.c.l.b16 %v1264
    %v1305 = vunpack.c.l.b16 %v1265
    %v1306 = vunpack.c.l.b16 %v1266
    %v1307 = vunpack.c.l.b16 %v1267
    %v1308 = vunpack.c.l.b16 %v1268
    %v1309 = vunpack.c.l.b16 %v1269
    %v1310 = vunpack.c.l.b16 %v1270
    %v1311 = vunpack.c.l.b16 %v1271
    %v1312 = vunpack.c.l.b16 %v1272
    %v1313 = vunpack.c.l.b16 %v1273
    %v1314 = vunpack.c.l.b16 %v1274
    %v1315 = vunpack.c.l.b16 %v1275
    %v1316 = vpack.c.b16 %v1301, %v1300
    %v1317 = vpack.c.b16 %v1303, %v1302
    %v1318 = vpack.c.b16 %v1305, %v1304
    %v1319 = vpack.c.b16 %v1307, %v1306
    %v1320 = vpack.c.b16 %v1309, %v1308
    %v1321 = vpack.c.b16 %v1311, %v1310
    %v1322 = vpack.c.b16 %v1313, %v1312
    %v1323 = vpack.c.b16 %v1315, %v1314
    %1332 = vmatprep.subr.bf16.mxu0 0
    %1333 = vmatpush1.bf16.msra.mxu0 %v1316
    %1334 = vmatprep.subr.bf16.mxu0 0
    %1335 = vmatpush1.bf16.msra.mxu0 %v1317
    %1336 = vmatprep.subr.bf16.mxu0 0
    %1337 = vmatpush1.bf16.msra.mxu0 %v1318
    %1338 = vmatprep.subr.bf16.mxu0 0
    %1339 = vmatpush1.bf16.msra.mxu0 %v1319
    %1340 = vmatprep.subr.bf16.mxu0 0
    %1341 = vmatpush1.bf16.msra.mxu0 %v1320
    %1342 = vmatprep.subr.bf16.mxu0 0
    %1343 = vmatpush1.bf16.msra.mxu0 %v1321
    %1344 = vmatprep.subr.bf16.mxu0 0
    %1345 = vmatpush1.bf16.msra.mxu0 %v1322
    %1346 = vmatprep.subr.bf16.mxu0 0
    %1347 = vmatpush1.bf16.msra.mxu0 %v1323
    %1348 = vmatprep.subr.bf16.mxu0 0
    %1349 = vmatpush1.bf16.msra.mxu0 0
    %1350 = vmatprep.subr.bf16.mxu0 0
    %1351 = vmatpush1.bf16.msra.mxu0 0
    %1352 = vmatprep.subr.bf16.mxu0 0
    %1353 = vmatpush1.bf16.msra.mxu0 0
    %1354 = vmatprep.subr.bf16.mxu0 0
    %1355 = vmatpush1.bf16.msra.mxu0 0
    %1356 = vmatprep.subr.bf16.mxu0 0
    %1357 = vmatpush1.bf16.msra.mxu0 0
    %1358 = vmatprep.subr.bf16.mxu0 0
    %1359 = vmatpush1.bf16.msra.mxu0 0
    %1360 = vmatprep.subr.bf16.mxu0 0
    %1361 = vmatpush1.bf16.msra.mxu0 0
    %1362 = vmatprep.subr.bf16.mxu0 0
    %1363 = vmatpush1.bf16.msra.mxu0 0
    %1364 = vmatprep.mubr.bf16.mxu0 0
    %1365 = vmatmul.mubr.bf16.gmra.mrb[0].mxu0 %v1277
    %v1366 = vpop.f32.mrb[0].mxu0
    %v1367 = vadd.f32 %v1282, %v1366
    %v1368 = vpop.f32.mrb[0].mxu0
    %v1369 = vpop.f32.mrb[0].mxu0
    %v1370 = vpop.f32.mrb[0].mxu0
    %1371 = vdwg.mxu0
    %v1372 = vld [vmem:[%s11] sm:$0xf]
    %v1373 = vld [vmem:[%s11 + $0x4] sm:$0xf]
    %v1374 = vld [vmem:[%s11 + $0x8] sm:$0xf]
    %v1375 = vld [vmem:[%s11 + $0xc] sm:$0xf]
    %v1376 = vld [vmem:[%s11 + $0x10] sm:$0xf]
    %v1377 = vld [vmem:[%s11 + $0x14] sm:$0xf]
    %v1378 = vld [vmem:[%s11 + $0x18] sm:$0xf]
    %v1379 = vld [vmem:[%s11 + $0x1c] sm:$0xf]
    %v1380 = vld [vmem:[%s11 + $0x20] sm:$0xf]
    %v1381 = vld [vmem:[%s11 + $0x24] sm:$0xf]
    %v1382 = vld [vmem:[%s11 + $0x28] sm:$0xf]
    %v1383 = vld [vmem:[%s11 + $0x2c] sm:$0xf]
    %v1384 = vld [vmem:[%s11 + $0x30] sm:$0xf]
    %v1385 = vld [vmem:[%s11 + $0x34] sm:$0xf]
    %v1386 = vld [vmem:[%s11 + $0x38] sm:$0xf]
    %v1387 = vld [vmem:[%s11 + $0x3c] sm:$0xf]
    %v1388 = vld [vmem:[%s12] sm:$0x1]
    %v1389 = vpack.c.bf16 %v1367, %v1367
    %v1391 = vlaneseq
    %v1392 = vshrl.u32 %v1391, 7
    %v1393 = vsub.s32 0, %v1392
    %v1394 = vrot.slane %v1388, %v1393
    %v1412 = vunpack.c.l.b16 %v1372
    %v1413 = vunpack.c.l.b16 %v1373
    %v1414 = vunpack.c.l.b16 %v1374
    %v1415 = vunpack.c.l.b16 %v1375
    %v1416 = vunpack.c.l.b16 %v1376
    %v1417 = vunpack.c.l.b16 %v1377
    %v1418 = vunpack.c.l.b16 %v1378
    %v1419 = vunpack.c.l.b16 %v1379
    %v1420 = vunpack.c.l.b16 %v1380
    %v1421 = vunpack.c.l.b16 %v1381
    %v1422 = vunpack.c.l.b16 %v1382
    %v1423 = vunpack.c.l.b16 %v1383
    %v1424 = vunpack.c.l.b16 %v1384
    %v1425 = vunpack.c.l.b16 %v1385
    %v1426 = vunpack.c.l.b16 %v1386
    %v1427 = vunpack.c.l.b16 %v1387
    %v1428 = vpack.c.b16 %v1413, %v1412
    %v1429 = vpack.c.b16 %v1415, %v1414
    %v1430 = vpack.c.b16 %v1417, %v1416
    %v1431 = vpack.c.b16 %v1419, %v1418
    %v1432 = vpack.c.b16 %v1421, %v1420
    %v1433 = vpack.c.b16 %v1423, %v1422
    %v1434 = vpack.c.b16 %v1425, %v1424
    %v1435 = vpack.c.b16 %v1427, %v1426
    %1444 = vmatprep.subr.bf16.mxu0 0
    %1445 = vmatpush1.bf16.msra.mxu0 %v1428
    %1446 = vmatprep.subr.bf16.mxu0 0
    %1447 = vmatpush1.bf16.msra.mxu0 %v1429
    %1448 = vmatprep.subr.bf16.mxu0 0
    %1449 = vmatpush1.bf16.msra.mxu0 %v1430
    %1450 = vmatprep.subr.bf16.mxu0 0
    %1451 = vmatpush1.bf16.msra.mxu0 %v1431
    %1452 = vmatprep.subr.bf16.mxu0 0
    %1453 = vmatpush1.bf16.msra.mxu0 %v1432
    %1454 = vmatprep.subr.bf16.mxu0 0
    %1455 = vmatpush1.bf16.msra.mxu0 %v1433
    %1456 = vmatprep.subr.bf16.mxu0 0
    %1457 = vmatpush1.bf16.msra.mxu0 %v1434
    %1458 = vmatprep.subr.bf16.mxu0 0
    %1459 = vmatpush1.bf16.msra.mxu0 %v1435
    %1460 = vmatprep.subr.bf16.mxu0 0
    %1461 = vmatpush1.bf16.msra.mxu0 0
    %1462 = vmatprep.subr.bf16.mxu0 0
    %1463 = vmatpush1.bf16.msra.mxu0 0
    %1464 = vmatprep.subr.bf16.mxu0 0
    %1465 = vmatpush1.bf16.msra.mxu0 0
    %1466 = vmatprep.subr.bf16.mxu0 0
    %1467 = vmatpush1.bf16.msra.mxu0 0
    %1468 = vmatprep.subr.bf16.mxu0 0
    %1469 = vmatpush1.bf16.msra.mxu0 0
    %1470 = vmatprep.subr.bf16.mxu0 0
    %1471 = vmatpush1.bf16.msra.mxu0 0
    %1472 = vmatprep.subr.bf16.mxu0 0
    %1473 = vmatpush1.bf16.msra.mxu0 0
    %1474 = vmatprep.subr.bf16.mxu0 0
    %1475 = vmatpush1.bf16.msra.mxu0 0
    %1476 = vmatprep.mubr.bf16.mxu0 0
    %1477 = vmatmul.mubr.bf16.gmra.mrb[0].mxu0 %v1389
    %v1478 = vpop.f32.mrb[0].mxu0
    %v1479 = vadd.f32 %v1394, %v1478
    %v1480 = vpop.f32.mrb[0].mxu0
    %v1481 = vpop.f32.mrb[0].mxu0
    %v1482 = vpop.f32.mrb[0].mxu0
    %1483 = vdwg.mxu0
    %v1484 = vtanh.pop %v1479
    %v1485 = vld [vmem:[%s13] sm:$0xf]
    %v1486 = vld [vmem:[%s13 + $0x4] sm:$0xf]
    %v1487 = vld [vmem:[%s13 + $0x8] sm:$0xf]
    %v1488 = vld [vmem:[%s13 + $0xc] sm:$0xf]
    %v1489 = vld [vmem:[%s13 + $0x10] sm:$0xf]
    %v1490 = vld [vmem:[%s13 + $0x14] sm:$0xf]
    %v1491 = vld [vmem:[%s13 + $0x18] sm:$0xf]
    %v1492 = vld [vmem:[%s13 + $0x1c] sm:$0xf]
    %v1493 = vld [vmem:[%s13 + $0x20] sm:$0xf]
    %v1494 = vld [vmem:[%s13 + $0x24] sm:$0xf]
    %v1495 = vld [vmem:[%s13 + $0x28] sm:$0xf]
    %v1496 = vld [vmem:[%s13 + $0x2c] sm:$0xf]
    %v1497 = vld [vmem:[%s13 + $0x30] sm:$0xf]
    %v1498 = vld [vmem:[%s13 + $0x34] sm:$0xf]
    %v1499 = vld [vmem:[%s13 + $0x38] sm:$0xf]
    %v1500 = vld [vmem:[%s13 + $0x3c] sm:$0xf]
    %v1501 = vld [vmem:[%s14] sm:$0x1]
    %v1502 = vpack.c.bf16 %v1484, %v1484
    %v1504 = vlaneseq
    %v1505 = vshrl.u32 %v1504, 7
    %v1506 = vsub.s32 0, %v1505
    %v1507 = vrot.slane %v1501, %v1506
    %v1525 = vunpack.c.l.b16 %v1485
    %v1526 = vunpack.c.l.b16 %v1486
    %v1527 = vunpack.c.l.b16 %v1487
    %v1528 = vunpack.c.l.b16 %v1488
    %v1529 = vunpack.c.l.b16 %v1489
    %v1530 = vunpack.c.l.b16 %v1490
    %v1531 = vunpack.c.l.b16 %v1491
    %v1532 = vunpack.c.l.b16 %v1492
    %v1533 = vunpack.c.l.b16 %v1493
    %v1534 = vunpack.c.l.b16 %v1494
    %v1535 = vunpack.c.l.b16 %v1495
    %v1536 = vunpack.c.l.b16 %v1496
    %v1537 = vunpack.c.l.b16 %v1497
    %v1538 = vunpack.c.l.b16 %v1498
    %v1539 = vunpack.c.l.b16 %v1499
    %v1540 = vunpack.c.l.b16 %v1500
    %v1541 = vpack.c.b16 %v1526, %v1525
    %v1542 = vpack.c.b16 %v1528, %v1527
    %v1543 = vpack.c.b16 %v1530, %v1529
    %v1544 = vpack.c.b16 %v1532, %v1531
    %v1545 = vpack.c.b16 %v1534, %v1533
    %v1546 = vpack.c.b16 %v1536, %v1535
    %v1547 = vpack.c.b16 %v1538, %v1537
    %v1548 = vpack.c.b16 %v1540, %v1539
    %1557 = vmatprep.subr.bf16.mxu0 0
    %1558 = vmatpush1.bf16.msra.mxu0 %v1541
    %1559 = vmatprep.subr.bf16.mxu0 0
    %1560 = vmatpush1.bf16.msra.mxu0 %v1542
    %1561 = vmatprep.subr.bf16.mxu0 0
    %1562 = vmatpush1.bf16.msra.mxu0 %v1543
    %1563 = vmatprep.subr.bf16.mxu0 0
    %1564 = vmatpush1.bf16.msra.mxu0 %v1544
    %1565 = vmatprep.subr.bf16.mxu0 0
    %1566 = vmatpush1.bf16.msra.mxu0 %v1545
    %1567 = vmatprep.subr.bf16.mxu0 0
    %1568 = vmatpush1.bf16.msra.mxu0 %v1546
    %1569 = vmatprep.subr.bf16.mxu0 0
    %1570 = vmatpush1.bf16.msra.mxu0 %v1547
    %1571 = vmatprep.subr.bf16.mxu0 0
    %1572 = vmatpush1.bf16.msra.mxu0 %v1548
    %1573 = vmatprep.subr.bf16.mxu0 0
    %1574 = vmatpush1.bf16.msra.mxu0 0
    %1575 = vmatprep.subr.bf16.mxu0 0
    %1576 = vmatpush1.bf16.msra.mxu0 0
    %1577 = vmatprep.subr.bf16.mxu0 0
    %1578 = vmatpush1.bf16.msra.mxu0 0
    %1579 = vmatprep.subr.bf16.mxu0 0
    %1580 = vmatpush1.bf16.msra.mxu0 0
    %1581 = vmatprep.subr.bf16.mxu0 0
    %1582 = vmatpush1.bf16.msra.mxu0 0
    %1583 = vmatprep.subr.bf16.mxu0 0
    %1584 = vmatpush1.bf16.msra.mxu0 0
    %1585 = vmatprep.subr.bf16.mxu0 0
    %1586 = vmatpush1.bf16.msra.mxu0 0
    %1587 = vmatprep.subr.bf16.mxu0 0
    %1588 = vmatpush1.bf16.msra.mxu0 0
    %1589 = vmatprep.mubr.bf16.mxu0 0
    %1590 = vmatmul.mubr.bf16.gmra.mrb[0].mxu0 %v1502
    %v1591 = vpop.f32.mrb[0].mxu0
    %v1592 = vadd.f32 %v1507, %v1591
    %v1593 = vpop.f32.mrb[0].mxu0
    %v1594 = vpop.f32.mrb[0].mxu0
    %v1595 = vpop.f32.mrb[0].mxu0
    %1596 = vdwg.mxu0
    %v1597 = vtanh.pop %v1592
    %v1598 = vld [vmem:[%s15] sm:$0xf]
    %v1599 = vld [vmem:[%s15 + $0x4] sm:$0xf]
    %v1600 = vld [vmem:[%s15 + $0x8] sm:$0xf]
    %v1601 = vld [vmem:[%s15 + $0xc] sm:$0xf]
    %v1602 = vld [vmem:[%s15 + $0x10] sm:$0xf]
    %v1603 = vld [vmem:[%s15 + $0x14] sm:$0xf]
    %v1604 = vld [vmem:[%s15 + $0x18] sm:$0xf]
    %v1605 = vld [vmem:[%s15 + $0x1c] sm:$0xf]
    %v1606 = vld [vmem:[%s15 + $0x20] sm:$0xf]
    %v1607 = vld [vmem:[%s15 + $0x24] sm:$0xf]
    %v1608 = vld [vmem:[%s15 + $0x28] sm:$0xf]
    %v1609 = vld [vmem:[%s15 + $0x2c] sm:$0xf]
    %v1610 = vld [vmem:[%s15 + $0x30] sm:$0xf]
    %v1611 = vld [vmem:[%s15 + $0x34] sm:$0xf]
    %v1612 = vld [vmem:[%s15 + $0x38] sm:$0xf]
    %v1613 = vld [vmem:[%s15 + $0x3c] sm:$0xf]
    %v1614 = vld [vmem:[%s16] sm:$0x1]
    %v1615 = vpack.c.bf16 %v1597, %v1597
    %v1617 = vlaneseq
    %v1618 = vshrl.u32 %v1617, 7
    %v1619 = vsub.s32 0, %v1618
    %v1620 = vrot.slane %v1614, %v1619
    %v1638 = vunpack.c.l.b16 %v1598
    %v1639 = vunpack.c.l.b16 %v1599
    %v1640 = vunpack.c.l.b16 %v1600
    %v1641 = vunpack.c.l.b16 %v1601
    %v1642 = vunpack.c.l.b16 %v1602
    %v1643 = vunpack.c.l.b16 %v1603
    %v1644 = vunpack.c.l.b16 %v1604
    %v1645 = vunpack.c.l.b16 %v1605
    %v1646 = vunpack.c.l.b16 %v1606
    %v1647 = vunpack.c.l.b16 %v1607
    %v1648 = vunpack.c.l.b16 %v1608
    %v1649 = vunpack.c.l.b16 %v1609
    %v1650 = vunpack.c.l.b16 %v1610
    %v1651 = vunpack.c.l.b16 %v1611
    %v1652 = vunpack.c.l.b16 %v1612
    %v1653 = vunpack.c.l.b16 %v1613
    %v1654 = vpack.c.b16 %v1639, %v1638
    %v1655 = vpack.c.b16 %v1641, %v1640
    %v1656 = vpack.c.b16 %v1643, %v1642
    %v1657 = vpack.c.b16 %v1645, %v1644
    %v1658 = vpack.c.b16 %v1647, %v1646
    %v1659 = vpack.c.b16 %v1649, %v1648
    %v1660 = vpack.c.b16 %v1651, %v1650
    %v1661 = vpack.c.b16 %v1653, %v1652
    %1670 = vmatprep.subr.bf16.mxu0 0
    %1671 = vmatpush1.bf16.msra.mxu0 %v1654
    %1672 = vmatprep.subr.bf16.mxu0 0
    %1673 = vmatpush1.bf16.msra.mxu0 %v1655
    %1674 = vmatprep.subr.bf16.mxu0 0
    %1675 = vmatpush1.bf16.msra.mxu0 %v1656
    %1676 = vmatprep.subr.bf16.mxu0 0
    %1677 = vmatpush1.bf16.msra.mxu0 %v1657
    %1678 = vmatprep.subr.bf16.mxu0 0
    %1679 = vmatpush1.bf16.msra.mxu0 %v1658
    %1680 = vmatprep.subr.bf16.mxu0 0
    %1681 = vmatpush1.bf16.msra.mxu0 %v1659
    %1682 = vmatprep.subr.bf16.mxu0 0
    %1683 = vmatpush1.bf16.msra.mxu0 %v1660
    %1684 = vmatprep.subr.bf16.mxu0 0
    %1685 = vmatpush1.bf16.msra.mxu0 %v1661
    %1686 = vmatprep.subr.bf16.mxu0 0
    %1687 = vmatpush1.bf16.msra.mxu0 0
    %1688 = vmatprep.subr.bf16.mxu0 0
    %1689 = vmatpush1.bf16.msra.mxu0 0
    %1690 = vmatprep.subr.bf16.mxu0 0
    %1691 = vmatpush1.bf16.msra.mxu0 0
    %1692 = vmatprep.subr.bf16.mxu0 0
    %1693 = vmatpush1.bf16.msra.mxu0 0
    %1694 = vmatprep.subr.bf16.mxu0 0
    %1695 = vmatpush1.bf16.msra.mxu0 0
    %1696 = vmatprep.subr.bf16.mxu0 0
    %1697 = vmatpush1.bf16.msra.mxu0 0
    %1698 = vmatprep.subr.bf16.mxu0 0
    %1699 = vmatpush1.bf16.msra.mxu0 0
    %1700 = vmatprep.subr.bf16.mxu0 0
    %1701 = vmatpush1.bf16.msra.mxu0 0
    %1702 = vmatprep.mubr.bf16.mxu0 0
    %1703 = vmatmul.mubr.bf16.gmra.mrb[0].mxu0 %v1615
    %v1704 = vpop.f32.mrb[0].mxu0
    %v1705 = vadd.f32 %v1620, %v1704
    %v1706 = vpop.f32.mrb[0].mxu0
    %v1707 = vpop.f32.mrb[0].mxu0
    %v1708 = vpop.f32.mrb[0].mxu0
    %1709 = vdwg.mxu0
    %v1710 = vtanh.pop %v1705
    %v1711 = vld [vmem:[%s17] sm:$0xff]
    %v1712 = vld [vmem:[%s17 + $0x8] sm:$0xff]
    %v1713 = vld [vmem:[%s17 + $0x10] sm:$0xff]
    %v1714 = vld [vmem:[%s17 + $0x18] sm:$0xff]
    %v1715 = vld [vmem:[%s17 + $0x20] sm:$0xff]
    %v1716 = vld [vmem:[%s17 + $0x28] sm:$0xff]
    %v1717 = vld [vmem:[%s17 + $0x30] sm:$0xff]
    %v1718 = vld [vmem:[%s17 + $0x38] sm:$0xff]
    %v1719 = vld [vmem:[%s17 + $0x40] sm:$0xff]
    %v1720 = vld [vmem:[%s17 + $0x48] sm:$0xff]
    %v1721 = vld [vmem:[%s17 + $0x50] sm:$0xff]
    %v1722 = vld [vmem:[%s17 + $0x58] sm:$0xff]
    %v1723 = vld [vmem:[%s17 + $0x60] sm:$0xff]
    %v1724 = vld [vmem:[%s17 + $0x68] sm:$0xff]
    %v1725 = vld [vmem:[%s17 + $0x70] sm:$0xff]
    %v1726 = vld [vmem:[%s17 + $0x78] sm:$0xff]
    %v1727 = vld [vmem:[%s18] sm:$0x3]
    %v1728 = vpack.c.bf16 %v1710, %v1710
    %v1730 = vlaneseq
    %v1731 = vshrl.u32 %v1730, 7
    %v1732 = vsub.s32 0, %v1731
    %v1733 = vrot.slane %v1727, %v1732
    %v1734 = vlaneseq
    %v1735 = vshrl.u32 %v1734, 7
    %v1736 = vsub.s32 1, %v1735
    %v1737 = vrot.slane %v1727, %v1736
    %v1756 = vunpack.c.l.b16 %v1711
    %v1757 = vunpack.c.h.b16 %v1711
    %v1758 = vunpack.c.l.b16 %v1712
    %v1759 = vunpack.c.h.b16 %v1712
    %v1760 = vunpack.c.l.b16 %v1713
    %v1761 = vunpack.c.h.b16 %v1713
    %v1762 = vunpack.c.l.b16 %v1714
    %v1763 = vunpack.c.h.b16 %v1714
    %v1764 = vunpack.c.l.b16 %v1715
    %v1765 = vunpack.c.h.b16 %v1715
    %v1766 = vunpack.c.l.b16 %v1716
    %v1767 = vunpack.c.h.b16 %v1716
    %v1768 = vunpack.c.l.b16 %v1717
    %v1769 = vunpack.c.h.b16 %v1717
    %v1770 = vunpack.c.l.b16 %v1718
    %v1771 = vunpack.c.h.b16 %v1718
    %v1772 = vunpack.c.l.b16 %v1719
    %v1773 = vunpack.c.h.b16 %v1719
    %v1774 = vunpack.c.l.b16 %v1720
    %v1775 = vunpack.c.h.b16 %v1720
    %v1776 = vunpack.c.l.b16 %v1721
    %v1777 = vunpack.c.h.b16 %v1721
    %v1778 = vunpack.c.l.b16 %v1722
    %v1779 = vunpack.c.h.b16 %v1722
    %v1780 = vunpack.c.l.b16 %v1723
    %v1781 = vunpack.c.h.b16 %v1723
    %v1782 = vunpack.c.l.b16 %v1724
    %v1783 = vunpack.c.h.b16 %v1724
    %v1784 = vunpack.c.l.b16 %v1725
    %v1785 = vunpack.c.h.b16 %v1725
    %v1786 = vunpack.c.l.b16 %v1726
    %v1787 = vunpack.c.h.b16 %v1726
    %v1788 = vpack.c.b16 %v1758, %v1756
    %v1789 = vpack.c.b16 %v1759, %v1757
    %v1790 = vpack.c.b16 %v1762, %v1760
    %v1791 = vpack.c.b16 %v1763, %v1761
    %v1792 = vpack.c.b16 %v1766, %v1764
    %v1793 = vpack.c.b16 %v1767, %v1765
    %v1794 = vpack.c.b16 %v1770, %v1768
    %v1795 = vpack.c.b16 %v1771, %v1769
    %v1796 = vpack.c.b16 %v1774, %v1772
    %v1797 = vpack.c.b16 %v1775, %v1773
    %v1798 = vpack.c.b16 %v1778, %v1776
    %v1799 = vpack.c.b16 %v1779, %v1777
    %v1800 = vpack.c.b16 %v1782, %v1780
    %v1801 = vpack.c.b16 %v1783, %v1781
    %v1802 = vpack.c.b16 %v1786, %v1784
    %v1803 = vpack.c.b16 %v1787, %v1785
    %1820 = vmatprep.subr.bf16.mxu0 %v1789
    %1821 = vmatpush1.bf16.msra.mxu0 %v1788
    %1822 = vmatprep.subr.bf16.mxu0 %v1791
    %1823 = vmatpush1.bf16.msra.mxu0 %v1790
    %1824 = vmatprep.subr.bf16.mxu0 %v1793
    %1825 = vmatpush1.bf16.msra.mxu0 %v1792
    %1826 = vmatprep.subr.bf16.mxu0 %v1795
    %1827 = vmatpush1.bf16.msra.mxu0 %v1794
    %1828 = vmatprep.subr.bf16.mxu0 %v1797
    %1829 = vmatpush1.bf16.msra.mxu0 %v1796
    %1830 = vmatprep.subr.bf16.mxu0 %v1799
    %1831 = vmatpush1.bf16.msra.mxu0 %v1798
    %1832 = vmatprep.subr.bf16.mxu0 %v1801
    %1833 = vmatpush1.bf16.msra.mxu0 %v1800
    %1834 = vmatprep.subr.bf16.mxu0 %v1803
    %1835 = vmatpush1.bf16.msra.mxu0 %v1802
    %1836 = vmatprep.subr.bf16.mxu0 0
    %1837 = vmatpush1.bf16.msra.mxu0 0
    %1838 = vmatprep.subr.bf16.mxu0 0
    %1839 = vmatpush1.bf16.msra.mxu0 0
    %1840 = vmatprep.subr.bf16.mxu0 0
    %1841 = vmatpush1.bf16.msra.mxu0 0
    %1842 = vmatprep.subr.bf16.mxu0 0
    %1843 = vmatpush1.bf16.msra.mxu0 0
    %1844 = vmatprep.subr.bf16.mxu0 0
    %1845 = vmatpush1.bf16.msra.mxu0 0
    %1846 = vmatprep.subr.bf16.mxu0 0
    %1847 = vmatpush1.bf16.msra.mxu0 0
    %1848 = vmatprep.subr.bf16.mxu0 0
    %1849 = vmatpush1.bf16.msra.mxu0 0
    %1850 = vmatprep.subr.bf16.mxu0 0
    %1851 = vmatpush1.bf16.msra.mxu0 0
    %1852 = vmatprep.mubr.bf16.mxu0 0
    %1853 = vmatmul.mubr.bf16.gmra.mrb[0].mxu0 %v1728
    %v1854 = vpop.f32.mrb[0].mxu0
    %v1855 = vadd.f32 %v1733, %v1854
    %v1856 = vpop.f32.mrb[0].mxu0
    %v1857 = vadd.f32 %v1737, %v1856
    %v1858 = vpop.f32.mrb[0].mxu0
    %v1859 = vpop.f32.mrb[0].mxu0
    %1860 = vdwg.mxu0
    %v1861 = vtanh.pop %v1855
    %v1862 = vtanh.pop %v1857
    %v1863 = vld [vmem:[%s19] sm:$0xff]
    %v1864 = vld [vmem:[%s19 + $0x8] sm:$0xff]
    %v1865 = vld [vmem:[%s19 + $0x10] sm:$0xff]
    %v1866 = vld [vmem:[%s19 + $0x18] sm:$0xf]
    %v1867 = vld [vmem:[%s19 + $0x1c] sm:$0xff]
    %v1868 = vld [vmem:[%s19 + $0x24] sm:$0xff]
    %v1869 = vld [vmem:[%s19 + $0x2c] sm:$0xff]
    %v1870 = vld [vmem:[%s19 + $0x34] sm:$0xf]
    %v1871 = vld [vmem:[%s19 + $0x38] sm:$0xff]
    %v1872 = vld [vmem:[%s19 + $0x40] sm:$0xff]
    %v1873 = vld [vmem:[%s19 + $0x48] sm:$0xff]
    %v1874 = vld [vmem:[%s19 + $0x50] sm:$0xf]
    %v1875 = vld [vmem:[%s19 + $0x54] sm:$0xff]
    %v1876 = vld [vmem:[%s19 + $0x5c] sm:$0xff]
    %v1877 = vld [vmem:[%s19 + $0x64] sm:$0xff]
    %v1878 = vld [vmem:[%s19 + $0x6c] sm:$0xf]
    %v1879 = vld [vmem:[%s19 + $0x70] sm:$0xff]
    %v1880 = vld [vmem:[%s19 + $0x78] sm:$0xff]
    %v1881 = vld [vmem:[%s19 + $0x80] sm:$0xff]
    %v1882 = vld [vmem:[%s19 + $0x88] sm:$0xf]
    %v1883 = vld [vmem:[%s19 + $0x8c] sm:$0xff]
    %v1884 = vld [vmem:[%s19 + $0x94] sm:$0xff]
    %v1885 = vld [vmem:[%s19 + $0x9c] sm:$0xff]
    %v1886 = vld [vmem:[%s19 + $0xa4] sm:$0xf]
    %v1887 = vld [vmem:[%s19 + $0xa8] sm:$0xff]
    %v1888 = vld [vmem:[%s19 + $0xb0] sm:$0xff]
    %v1889 = vld [vmem:[%s19 + $0xb8] sm:$0xff]
    %v1890 = vld [vmem:[%s19 + $0xc0] sm:$0xf]
    %v1891 = vld [vmem:[%s19 + $0xc4] sm:$0xff]
    %v1892 = vld [vmem:[%s19 + $0xcc] sm:$0xff]
    %v1893 = vld [vmem:[%s19 + $0xd4] sm:$0xff]
    %v1894 = vld [vmem:[%s19 + $0xdc] sm:$0xf]
    %v1895 = vld [vmem:[%s19 + $0xe0] sm:$0xff]
    %v1896 = vld [vmem:[%s19 + $0xe8] sm:$0xff]
    %v1897 = vld [vmem:[%s19 + $0xf0] sm:$0xff]
    %v1898 = vld [vmem:[%s19 + $0xf8] sm:$0xf]
    %v1899 = vld [vmem:[%s19 + $0xfc] sm:$0xff]
    %v1900 = vld [vmem:[%s19 + $0x104] sm:$0xff]
    %v1901 = vld [vmem:[%s19 + $0x10c] sm:$0xff]
    %v1902 = vld [vmem:[%s19 + $0x114] sm:$0xf]
    %v1903 = vld [vmem:[%s19 + $0x118] sm:$0xff]
    %v1904 = vld [vmem:[%s19 + $0x120] sm:$0xff]
    %v1905 = vld [vmem:[%s19 + $0x128] sm:$0xff]
    %v1906 = vld [vmem:[%s19 + $0x130] sm:$0xf]
    %v1907 = vld [vmem:[%s19 + $0x134] sm:$0xff]
    %v1908 = vld [vmem:[%s19 + $0x13c] sm:$0xff]
    %v1909 = vld [vmem:[%s19 + $0x144] sm:$0xff]
    %v1910 = vld [vmem:[%s19 + $0x14c] sm:$0xf]
    %v1911 = vld [vmem:[%s19 + $0x150] sm:$0xff]
    %v1912 = vld [vmem:[%s19 + $0x158] sm:$0xff]
    %v1913 = vld [vmem:[%s19 + $0x160] sm:$0xff]
    %v1914 = vld [vmem:[%s19 + $0x168] sm:$0xf]
    %v1915 = vld [vmem:[%s19 + $0x16c] sm:$0xff]
    %v1916 = vld [vmem:[%s19 + $0x174] sm:$0xff]
    %v1917 = vld [vmem:[%s19 + $0x17c] sm:$0xff]
    %v1918 = vld [vmem:[%s19 + $0x184] sm:$0xf]
    %v1919 = vld [vmem:[%s19 + $0x188] sm:$0xff]
    %v1920 = vld [vmem:[%s19 + $0x190] sm:$0xff]
    %v1921 = vld [vmem:[%s19 + $0x198] sm:$0xff]
    %v1922 = vld [vmem:[%s19 + $0x1a0] sm:$0xf]
    %v1923 = vld [vmem:[%s19 + $0x1a4] sm:$0xff]
    %v1924 = vld [vmem:[%s19 + $0x1ac] sm:$0xff]
    %v1925 = vld [vmem:[%s19 + $0x1b4] sm:$0xff]
    %v1926 = vld [vmem:[%s19 + $0x1bc] sm:$0xf]
    %v1927 = vld [vmem:[%s19 + $0x1c0] sm:$0xff]
    %v1928 = vld [vmem:[%s19 + $0x1c8] sm:$0xff]
    %v1929 = vld [vmem:[%s19 + $0x1d0] sm:$0xff]
    %v1930 = vld [vmem:[%s19 + $0x1d8] sm:$0xf]
    %v1931 = vld [vmem:[%s19 + $0x1dc] sm:$0xff]
    %v1932 = vld [vmem:[%s19 + $0x1e4] sm:$0xff]
    %v1933 = vld [vmem:[%s19 + $0x1ec] sm:$0xff]
    %v1934 = vld [vmem:[%s19 + $0x1f4] sm:$0xf]
    %v1935 = vld [vmem:[%s19 + $0x1f8] sm:$0xff]
    %v1936 = vld [vmem:[%s19 + $0x200] sm:$0xff]
    %v1937 = vld [vmem:[%s19 + $0x208] sm:$0xff]
    %v1938 = vld [vmem:[%s19 + $0x210] sm:$0xf]
    %v1939 = vld [vmem:[%s19 + $0x214] sm:$0xff]
    %v1940 = vld [vmem:[%s19 + $0x21c] sm:$0xff]
    %v1941 = vld [vmem:[%s19 + $0x224] sm:$0xff]
    %v1942 = vld [vmem:[%s19 + $0x22c] sm:$0xf]
    %v1943 = vld [vmem:[%s19 + $0x230] sm:$0xff]
    %v1944 = vld [vmem:[%s19 + $0x238] sm:$0xff]
    %v1945 = vld [vmem:[%s19 + $0x240] sm:$0xff]
    %v1946 = vld [vmem:[%s19 + $0x248] sm:$0xf]
    %v1947 = vld [vmem:[%s19 + $0x24c] sm:$0xff]
    %v1948 = vld [vmem:[%s19 + $0x254] sm:$0xff]
    %v1949 = vld [vmem:[%s19 + $0x25c] sm:$0xff]
    %v1950 = vld [vmem:[%s19 + $0x264] sm:$0xf]
    %v1951 = vld [vmem:[%s19 + $0x268] sm:$0xff]
    %v1952 = vld [vmem:[%s19 + $0x270] sm:$0xff]
    %v1953 = vld [vmem:[%s19 + $0x278] sm:$0xff]
    %v1954 = vld [vmem:[%s19 + $0x280] sm:$0xf]
    %v1955 = vld [vmem:[%s19 + $0x284] sm:$0xff]
    %v1956 = vld [vmem:[%s19 + $0x28c] sm:$0xff]
    %v1957 = vld [vmem:[%s19 + $0x294] sm:$0xff]
    %v1958 = vld [vmem:[%s19 + $0x29c] sm:$0xf]
    %v1959 = vld [vmem:[%s19 + $0x2a0] sm:$0xff]
    %v1960 = vld [vmem:[%s19 + $0x2a8] sm:$0xff]
    %v1961 = vld [vmem:[%s19 + $0x2b0] sm:$0xff]
    %v1962 = vld [vmem:[%s19 + $0x2b8] sm:$0xf]
    %v1963 = vld [vmem:[%s19 + $0x2bc] sm:$0xff]
    %v1964 = vld [vmem:[%s19 + $0x2c4] sm:$0xff]
    %v1965 = vld [vmem:[%s19 + $0x2cc] sm:$0xff]
    %v1966 = vld [vmem:[%s19 + $0x2d4] sm:$0xf]
    %v1967 = vld [vmem:[%s19 + $0x2d8] sm:$0xff]
    %v1968 = vld [vmem:[%s19 + $0x2e0] sm:$0xff]
    %v1969 = vld [vmem:[%s19 + $0x2e8] sm:$0xff]
    %v1970 = vld [vmem:[%s19 + $0x2f0] sm:$0xf]
    %v1971 = vld [vmem:[%s19 + $0x2f4] sm:$0xff]
    %v1972 = vld [vmem:[%s19 + $0x2fc] sm:$0xff]
    %v1973 = vld [vmem:[%s19 + $0x304] sm:$0xff]
    %v1974 = vld [vmem:[%s19 + $0x30c] sm:$0xf]
    %v1975 = vld [vmem:[%s19 + $0x310] sm:$0xff]
    %v1976 = vld [vmem:[%s19 + $0x318] sm:$0xff]
    %v1977 = vld [vmem:[%s19 + $0x320] sm:$0xff]
    %v1978 = vld [vmem:[%s19 + $0x328] sm:$0xf]
    %v1979 = vld [vmem:[%s19 + $0x32c] sm:$0xff]
    %v1980 = vld [vmem:[%s19 + $0x334] sm:$0xff]
    %v1981 = vld [vmem:[%s19 + $0x33c] sm:$0xff]
    %v1982 = vld [vmem:[%s19 + $0x344] sm:$0xf]
    %v1983 = vld [vmem:[%s19 + $0x348] sm:$0xff]
    %v1984 = vld [vmem:[%s19 + $0x350] sm:$0xff]
    %v1985 = vld [vmem:[%s19 + $0x358] sm:$0xff]
    %v1986 = vld [vmem:[%s19 + $0x360] sm:$0xf]
    %v1987 = vld [vmem:[%s19 + $0x364] sm:$0xff]
    %v1988 = vld [vmem:[%s19 + $0x36c] sm:$0xff]
    %v1989 = vld [vmem:[%s19 + $0x374] sm:$0xff]
    %v1990 = vld [vmem:[%s19 + $0x37c] sm:$0xf]
    %v1991 = vld [vmem:[%s20] sm:$0x7f]
    %v1992 = vpack.c.bf16 %v1861, %v1861
    %v1993 = vpack.c.bf16 %v1862, %v1862
    %v1995 = vlaneseq
    %v1996 = vshrl.u32 %v1995, 7
    %v1997 = vsub.s32 0, %v1996
    %v1998 = vrot.slane %v1991, %v1997
    %v1999 = vlaneseq
    %v2000 = vshrl.u32 %v1999, 7
    %v2001 = vsub.s32 1, %v2000
    %v2002 = vrot.slane %v1991, %v2001
    %v2003 = vlaneseq
    %v2004 = vshrl.u32 %v2003, 7
    %v2005 = vsub.s32 2, %v2004
    %v2006 = vrot.slane %v1991, %v2005
    %v2007 = vlaneseq
    %v2008 = vshrl.u32 %v2007, 7
    %v2009 = vsub.s32 3, %v2008
    %v2010 = vrot.slane %v1991, %v2009
    %v2011 = vlaneseq
    %v2012 = vshrl.u32 %v2011, 7
    %v2013 = vsub.s32 4, %v2012
    %v2014 = vrot.slane %v1991, %v2013
    %v2015 = vlaneseq
    %v2016 = vshrl.u32 %v2015, 7
    %v2017 = vsub.s32 5, %v2016
    %v2018 = vrot.slane %v1991, %v2017
    %v2019 = vlaneseq
    %v2020 = vshrl.u32 %v2019, 7
    %v2021 = vsub.s32 6, %v2020
    %v2022 = vrot.slane %v1991, %v2021
    %v2158 = vunpack.c.l.b16 %v1863
    %v2159 = vunpack.c.h.b16 %v1863
    %v2160 = vunpack.c.l.b16 %v1864
    %v2161 = vunpack.c.h.b16 %v1864
    %v2162 = vunpack.c.l.b16 %v1865
    %v2163 = vunpack.c.h.b16 %v1865
    %v2164 = vunpack.c.l.b16 %v1866
    %v2165 = vunpack.c.l.b16 %v1867
    %v2166 = vunpack.c.h.b16 %v1867
    %v2167 = vunpack.c.l.b16 %v1868
    %v2168 = vunpack.c.h.b16 %v1868
    %v2169 = vunpack.c.l.b16 %v1869
    %v2170 = vunpack.c.h.b16 %v1869
    %v2171 = vunpack.c.l.b16 %v1870
    %v2172 = vunpack.c.l.b16 %v1871
    %v2173 = vunpack.c.h.b16 %v1871
    %v2174 = vunpack.c.l.b16 %v1872
    %v2175 = vunpack.c.h.b16 %v1872
    %v2176 = vunpack.c.l.b16 %v1873
    %v2177 = vunpack.c.h.b16 %v1873
    %v2178 = vunpack.c.l.b16 %v1874
    %v2179 = vunpack.c.l.b16 %v1875
    %v2180 = vunpack.c.h.b16 %v1875
    %v2181 = vunpack.c.l.b16 %v1876
    %v2182 = vunpack.c.h.b16 %v1876
    %v2183 = vunpack.c.l.b16 %v1877
    %v2184 = vunpack.c.h.b16 %v1877
    %v2185 = vunpack.c.l.b16 %v1878
    %v2186 = vunpack.c.l.b16 %v1879
    %v2187 = vunpack.c.h.b16 %v1879
    %v2188 = vunpack.c.l.b16 %v1880
    %v2189 = vunpack.c.h.b16 %v1880
    %v2190 = vunpack.c.l.b16 %v1881
    %v2191 = vunpack.c.h.b16 %v1881
    %v2192 = vunpack.c.l.b16 %v1882
    %v2193 = vunpack.c.l.b16 %v1883
    %v2194 = vunpack.c.h.b16 %v1883
    %v2195 = vunpack.c.l.b16 %v1884
    %v2196 = vunpack.c.h.b16 %v1884
    %v2197 = vunpack.c.l.b16 %v1885
    %v2198 = vunpack.c.h.b16 %v1885
    %v2199 = vunpack.c.l.b16 %v1886
    %v2200 = vunpack.c.l.b16 %v1887
    %v2201 = vunpack.c.h.b16 %v1887
    %v2202 = vunpack.c.l.b16 %v1888
    %v2203 = vunpack.c.h.b16 %v1888
    %v2204 = vunpack.c.l.b16 %v1889
    %v2205 = vunpack.c.h.b16 %v1889
    %v2206 = vunpack.c.l.b16 %v1890
    %v2207 = vunpack.c.l.b16 %v1891
    %v2208 = vunpack.c.h.b16 %v1891
    %v2209 = vunpack.c.l.b16 %v1892
    %v2210 = vunpack.c.h.b16 %v1892
    %v2211 = vunpack.c.l.b16 %v1893
    %v2212 = vunpack.c.h.b16 %v1893
    %v2213 = vunpack.c.l.b16 %v1894
    %v2214 = vunpack.c.l.b16 %v1895
    %v2215 = vunpack.c.h.b16 %v1895
    %v2216 = vunpack.c.l.b16 %v1896
    %v2217 = vunpack.c.h.b16 %v1896
    %v2218 = vunpack.c.l.b16 %v1897
    %v2219 = vunpack.c.h.b16 %v1897
    %v2220 = vunpack.c.l.b16 %v1898
    %v2221 = vunpack.c.l.b16 %v1899
    %v2222 = vunpack.c.h.b16 %v1899
    %v2223 = vunpack.c.l.b16 %v1900
    %v2224 = vunpack.c.h.b16 %v1900
    %v2225 = vunpack.c.l.b16 %v1901
    %v2226 = vunpack.c.h.b16 %v1901
    %v2227 = vunpack.c.l.b16 %v1902
    %v2228 = vunpack.c.l.b16 %v1903
    %v2229 = vunpack.c.h.b16 %v1903
    %v2230 = vunpack.c.l.b16 %v1904
    %v2231 = vunpack.c.h.b16 %v1904
    %v2232 = vunpack.c.l.b16 %v1905
    %v2233 = vunpack.c.h.b16 %v1905
    %v2234 = vunpack.c.l.b16 %v1906
    %v2235 = vunpack.c.l.b16 %v1907
    %v2236 = vunpack.c.h.b16 %v1907
    %v2237 = vunpack.c.l.b16 %v1908
    %v2238 = vunpack.c.h.b16 %v1908
    %v2239 = vunpack.c.l.b16 %v1909
    %v2240 = vunpack.c.h.b16 %v1909
    %v2241 = vunpack.c.l.b16 %v1910
    %v2242 = vunpack.c.l.b16 %v1911
    %v2243 = vunpack.c.h.b16 %v1911
    %v2244 = vunpack.c.l.b16 %v1912
    %v2245 = vunpack.c.h.b16 %v1912
    %v2246 = vunpack.c.l.b16 %v1913
    %v2247 = vunpack.c.h.b16 %v1913
    %v2248 = vunpack.c.l.b16 %v1914
    %v2249 = vunpack.c.l.b16 %v1915
    %v2250 = vunpack.c.h.b16 %v1915
    %v2251 = vunpack.c.l.b16 %v1916
    %v2252 = vunpack.c.h.b16 %v1916
    %v2253 = vunpack.c.l.b16 %v1917
    %v2254 = vunpack.c.h.b16 %v1917
    %v2255 = vunpack.c.l.b16 %v1918
    %v2256 = vunpack.c.l.b16 %v1919
    %v2257 = vunpack.c.h.b16 %v1919
    %v2258 = vunpack.c.l.b16 %v1920
    %v2259 = vunpack.c.h.b16 %v1920
    %v2260 = vunpack.c.l.b16 %v1921
    %v2261 = vunpack.c.h.b16 %v1921
    %v2262 = vunpack.c.l.b16 %v1922
    %v2263 = vunpack.c.l.b16 %v1923
    %v2264 = vunpack.c.h.b16 %v1923
    %v2265 = vunpack.c.l.b16 %v1924
    %v2266 = vunpack.c.h.b16 %v1924
    %v2267 = vunpack.c.l.b16 %v1925
    %v2268 = vunpack.c.h.b16 %v1925
    %v2269 = vunpack.c.l.b16 %v1926
    %v2270 = vunpack.c.l.b16 %v1927
    %v2271 = vunpack.c.h.b16 %v1927
    %v2272 = vunpack.c.l.b16 %v1928
    %v2273 = vunpack.c.h.b16 %v1928
    %v2274 = vunpack.c.l.b16 %v1929
    %v2275 = vunpack.c.h.b16 %v1929
    %v2276 = vunpack.c.l.b16 %v1930
    %v2277 = vunpack.c.l.b16 %v1931
    %v2278 = vunpack.c.h.b16 %v1931
    %v2279 = vunpack.c.l.b16 %v1932
    %v2280 = vunpack.c.h.b16 %v1932
    %v2281 = vunpack.c.l.b16 %v1933
    %v2282 = vunpack.c.h.b16 %v1933
    %v2283 = vunpack.c.l.b16 %v1934
    %v2284 = vunpack.c.l.b16 %v1935
    %v2285 = vunpack.c.h.b16 %v1935
    %v2286 = vunpack.c.l.b16 %v1936
    %v2287 = vunpack.c.h.b16 %v1936
    %v2288 = vunpack.c.l.b16 %v1937
    %v2289 = vunpack.c.h.b16 %v1937
    %v2290 = vunpack.c.l.b16 %v1938
    %v2291 = vunpack.c.l.b16 %v1939
    %v2292 = vunpack.c.h.b16 %v1939
    %v2293 = vunpack.c.l.b16 %v1940
    %v2294 = vunpack.c.h.b16 %v1940
    %v2295 = vunpack.c.l.b16 %v1941
    %v2296 = vunpack.c.h.b16 %v1941
    %v2297 = vunpack.c.l.b16 %v1942
    %v2298 = vunpack.c.l.b16 %v1943
    %v2299 = vunpack.c.h.b16 %v1943
    %v2300 = vunpack.c.l.b16 %v1944
    %v2301 = vunpack.c.h.b16 %v1944
    %v2302 = vunpack.c.l.b16 %v1945
    %v2303 = vunpack.c.h.b16 %v1945
    %v2304 = vunpack.c.l.b16 %v1946
    %v2305 = vunpack.c.l.b16 %v1947
    %v2306 = vunpack.c.h.b16 %v1947
    %v2307 = vunpack.c.l.b16 %v1948
    %v2308 = vunpack.c.h.b16 %v1948
    %v2309 = vunpack.c.l.b16 %v1949
    %v2310 = vunpack.c.h.b16 %v1949
    %v2311 = vunpack.c.l.b16 %v1950
    %v2312 = vunpack.c.l.b16 %v1951
    %v2313 = vunpack.c.h.b16 %v1951
    %v2314 = vunpack.c.l.b16 %v1952
    %v2315 = vunpack.c.h.b16 %v1952
    %v2316 = vunpack.c.l.b16 %v1953
    %v2317 = vunpack.c.h.b16 %v1953
    %v2318 = vunpack.c.l.b16 %v1954
    %v2319 = vunpack.c.l.b16 %v1955
    %v2320 = vunpack.c.h.b16 %v1955
    %v2321 = vunpack.c.l.b16 %v1956
    %v2322 = vunpack.c.h.b16 %v1956
    %v2323 = vunpack.c.l.b16 %v1957
    %v2324 = vunpack.c.h.b16 %v1957
    %v2325 = vunpack.c.l.b16 %v1958
    %v2326 = vunpack.c.l.b16 %v1959
    %v2327 = vunpack.c.h.b16 %v1959
    %v2328 = vunpack.c.l.b16 %v1960
    %v2329 = vunpack.c.h.b16 %v1960
    %v2330 = vunpack.c.l.b16 %v1961
    %v2331 = vunpack.c.h.b16 %v1961
    %v2332 = vunpack.c.l.b16 %v1962
    %v2333 = vunpack.c.l.b16 %v1963
    %v2334 = vunpack.c.h.b16 %v1963
    %v2335 = vunpack.c.l.b16 %v1964
    %v2336 = vunpack.c.h.b16 %v1964
    %v2337 = vunpack.c.l.b16 %v1965
    %v2338 = vunpack.c.h.b16 %v1965
    %v2339 = vunpack.c.l.b16 %v1966
    %v2340 = vunpack.c.l.b16 %v1967
    %v2341 = vunpack.c.h.b16 %v1967
    %v2342 = vunpack.c.l.b16 %v1968
    %v2343 = vunpack.c.h.b16 %v1968
    %v2344 = vunpack.c.l.b16 %v1969
    %v2345 = vunpack.c.h.b16 %v1969
    %v2346 = vunpack.c.l.b16 %v1970
    %v2347 = vunpack.c.l.b16 %v1971
    %v2348 = vunpack.c.h.b16 %v1971
    %v2349 = vunpack.c.l.b16 %v1972
    %v2350 = vunpack.c.h.b16 %v1972
    %v2351 = vunpack.c.l.b16 %v1973
    %v2352 = vunpack.c.h.b16 %v1973
    %v2353 = vunpack.c.l.b16 %v1974
    %v2354 = vunpack.c.l.b16 %v1975
    %v2355 = vunpack.c.h.b16 %v1975
    %v2356 = vunpack.c.l.b16 %v1976
    %v2357 = vunpack.c.h.b16 %v1976
    %v2358 = vunpack.c.l.b16 %v1977
    %v2359 = vunpack.c.h.b16 %v1977
    %v2360 = vunpack.c.l.b16 %v1978
    %v2361 = vunpack.c.l.b16 %v1979
    %v2362 = vunpack.c.h.b16 %v1979
    %v2363 = vunpack.c.l.b16 %v1980
    %v2364 = vunpack.c.h.b16 %v1980
    %v2365 = vunpack.c.l.b16 %v1981
    %v2366 = vunpack.c.h.b16 %v1981
    %v2367 = vunpack.c.l.b16 %v1982
    %v2368 = vunpack.c.l.b16 %v1983
    %v2369 = vunpack.c.h.b16 %v1983
    %v2370 = vunpack.c.l.b16 %v1984
    %v2371 = vunpack.c.h.b16 %v1984
    %v2372 = vunpack.c.l.b16 %v1985
    %v2373 = vunpack.c.h.b16 %v1985
    %v2374 = vunpack.c.l.b16 %v1986
    %v2375 = vunpack.c.l.b16 %v1987
    %v2376 = vunpack.c.h.b16 %v1987
    %v2377 = vunpack.c.l.b16 %v1988
    %v2378 = vunpack.c.h.b16 %v1988
    %v2379 = vunpack.c.l.b16 %v1989
    %v2380 = vunpack.c.h.b16 %v1989
    %v2381 = vunpack.c.l.b16 %v1990
    %v2382 = vpack.c.b16 %v2165, %v2158
    %v2383 = vpack.c.b16 %v2166, %v2159
    %v2384 = vpack.c.b16 %v2167, %v2160
    %v2385 = vpack.c.b16 %v2168, %v2161
    %v2386 = vpack.c.b16 %v2169, %v2162
    %v2387 = vpack.c.b16 %v2170, %v2163
    %v2388 = vpack.c.b16 %v2171, %v2164
    %v2389 = vpack.c.b16 %v2179, %v2172
    %v2390 = vpack.c.b16 %v2180, %v2173
    %v2391 = vpack.c.b16 %v2181, %v2174
    %v2392 = vpack.c.b16 %v2182, %v2175
    %v2393 = vpack.c.b16 %v2183, %v2176
    %v2394 = vpack.c.b16 %v2184, %v2177
    %v2395 = vpack.c.b16 %v2185, %v2178
    %v2396 = vpack.c.b16 %v2193, %v2186
    %v2397 = vpack.c.b16 %v2194, %v2187
    %v2398 = vpack.c.b16 %v2195, %v2188
    %v2399 = vpack.c.b16 %v2196, %v2189
    %v2400 = vpack.c.b16 %v2197, %v2190
    %v2401 = vpack.c.b16 %v2198, %v2191
    %v2402 = vpack.c.b16 %v2199, %v2192
    %v2403 = vpack.c.b16 %v2207, %v2200
    %v2404 = vpack.c.b16 %v2208, %v2201
    %v2405 = vpack.c.b16 %v2209, %v2202
    %v2406 = vpack.c.b16 %v2210, %v2203
    %v2407 = vpack.c.b16 %v2211, %v2204
    %v2408 = vpack.c.b16 %v2212, %v2205
    %v2409 = vpack.c.b16 %v2213, %v2206
    %v2410 = vpack.c.b16 %v2221, %v2214
    %v2411 = vpack.c.b16 %v2222, %v2215
    %v2412 = vpack.c.b16 %v2223, %v2216
    %v2413 = vpack.c.b16 %v2224, %v2217
    %v2414 = vpack.c.b16 %v2225, %v2218
    %v2415 = vpack.c.b16 %v2226, %v2219
    %v2416 = vpack.c.b16 %v2227, %v2220
    %v2417 = vpack.c.b16 %v2235, %v2228
    %v2418 = vpack.c.b16 %v2236, %v2229
    %v2419 = vpack.c.b16 %v2237, %v2230
    %v2420 = vpack.c.b16 %v2238, %v2231
    %v2421 = vpack.c.b16 %v2239, %v2232
    %v2422 = vpack.c.b16 %v2240, %v2233
    %v2423 = vpack.c.b16 %v2241, %v2234
    %v2424 = vpack.c.b16 %v2249, %v2242
    %v2425 = vpack.c.b16 %v2250, %v2243
    %v2426 = vpack.c.b16 %v2251, %v2244
    %v2427 = vpack.c.b16 %v2252, %v2245
    %v2428 = vpack.c.b16 %v2253, %v2246
    %v2429 = vpack.c.b16 %v2254, %v2247
    %v2430 = vpack.c.b16 %v2255, %v2248
    %v2431 = vpack.c.b16 %v2263, %v2256
    %v2432 = vpack.c.b16 %v2264, %v2257
    %v2433 = vpack.c.b16 %v2265, %v2258
    %v2434 = vpack.c.b16 %v2266, %v2259
    %v2435 = vpack.c.b16 %v2267, %v2260
    %v2436 = vpack.c.b16 %v2268, %v2261
    %v2437 = vpack.c.b16 %v2269, %v2262
    %v2438 = vpack.c.b16 %v2277, %v2270
    %v2439 = vpack.c.b16 %v2278, %v2271
    %v2440 = vpack.c.b16 %v2279, %v2272
    %v2441 = vpack.c.b16 %v2280, %v2273
    %v2442 = vpack.c.b16 %v2281, %v2274
    %v2443 = vpack.c.b16 %v2282, %v2275
    %v2444 = vpack.c.b16 %v2283, %v2276
    %v2445 = vpack.c.b16 %v2291, %v2284
    %v2446 = vpack.c.b16 %v2292, %v2285
    %v2447 = vpack.c.b16 %v2293, %v2286
    %v2448 = vpack.c.b16 %v2294, %v2287
    %v2449 = vpack.c.b16 %v2295, %v2288
    %v2450 = vpack.c.b16 %v2296, %v2289
    %v2451 = vpack.c.b16 %v2297, %v2290
    %v2452 = vpack.c.b16 %v2305, %v2298
    %v2453 = vpack.c.b16 %v2306, %v2299
    %v2454 = vpack.c.b16 %v2307, %v2300
    %v2455 = vpack.c.b16 %v2308, %v2301
    %v2456 = vpack.c.b16 %v2309, %v2302
    %v2457 = vpack.c.b16 %v2310, %v2303
    %v2458 = vpack.c.b16 %v2311, %v2304
    %v2459 = vpack.c.b16 %v2319, %v2312
    %v2460 = vpack.c.b16 %v2320, %v2313
    %v2461 = vpack.c.b16 %v2321, %v2314
    %v2462 = vpack.c.b16 %v2322, %v2315
    %v2463 = vpack.c.b16 %v2323, %v2316
    %v2464 = vpack.c.b16 %v2324, %v2317
    %v2465 = vpack.c.b16 %v2325, %v2318
    %v2466 = vpack.c.b16 %v2333, %v2326
    %v2467 = vpack.c.b16 %v2334, %v2327
    %v2468 = vpack.c.b16 %v2335, %v2328
    %v2469 = vpack.c.b16 %v2336, %v2329
    %v2470 = vpack.c.b16 %v2337, %v2330
    %v2471 = vpack.c.b16 %v2338, %v2331
    %v2472 = vpack.c.b16 %v2339, %v2332
    %v2473 = vpack.c.b16 %v2347, %v2340
    %v2474 = vpack.c.b16 %v2348, %v2341
    %v2475 = vpack.c.b16 %v2349, %v2342
    %v2476 = vpack.c.b16 %v2350, %v2343
    %v2477 = vpack.c.b16 %v2351, %v2344
    %v2478 = vpack.c.b16 %v2352, %v2345
    %v2479 = vpack.c.b16 %v2353, %v2346
    %v2480 = vpack.c.b16 %v2361, %v2354
    %v2481 = vpack.c.b16 %v2362, %v2355
    %v2482 = vpack.c.b16 %v2363, %v2356
    %v2483 = vpack.c.b16 %v2364, %v2357
    %v2484 = vpack.c.b16 %v2365, %v2358
    %v2485 = vpack.c.b16 %v2366, %v2359
    %v2486 = vpack.c.b16 %v2367, %v2360
    %v2487 = vpack.c.b16 %v2375, %v2368
    %v2488 = vpack.c.b16 %v2376, %v2369
    %v2489 = vpack.c.b16 %v2377, %v2370
    %v2490 = vpack.c.b16 %v2378, %v2371
    %v2491 = vpack.c.b16 %v2379, %v2372
    %v2492 = vpack.c.b16 %v2380, %v2373
    %v2493 = vpack.c.b16 %v2381, %v2374
    %2606 = vmatprep.subr.bf16.mxu0 %v2383
    %2607 = vmatpush1.bf16.msra.mxu0 %v2382
    %2608 = vmatprep.subr.bf16.mxu0 %v2390
    %2609 = vmatpush1.bf16.msra.mxu0 %v2389
    %2610 = vmatprep.subr.bf16.mxu0 %v2397
    %2611 = vmatpush1.bf16.msra.mxu0 %v2396
    %2612 = vmatprep.subr.bf16.mxu0 %v2404
    %2613 = vmatpush1.bf16.msra.mxu0 %v2403
    %2614 = vmatprep.subr.bf16.mxu0 %v2411
    %2615 = vmatpush1.bf16.msra.mxu0 %v2410
    %2616 = vmatprep.subr.bf16.mxu0 %v2418
    %2617 = vmatpush1.bf16.msra.mxu0 %v2417
    %2618 = vmatprep.subr.bf16.mxu0 %v2425
    %2619 = vmatpush1.bf16.msra.mxu0 %v2424
    %2620 = vmatprep.subr.bf16.mxu0 %v2432
    %2621 = vmatpush1.bf16.msra.mxu0 %v2431
    %2622 = vmatprep.subr.bf16.mxu0 %v2439
    %2623 = vmatpush1.bf16.msra.mxu0 %v2438
    %2624 = vmatprep.subr.bf16.mxu0 %v2446
    %2625 = vmatpush1.bf16.msra.mxu0 %v2445
    %2626 = vmatprep.subr.bf16.mxu0 %v2453
    %2627 = vmatpush1.bf16.msra.mxu0 %v2452
    %2628 = vmatprep.subr.bf16.mxu0 %v2460
    %2629 = vmatpush1.bf16.msra.mxu0 %v2459
    %2630 = vmatprep.subr.bf16.mxu0 %v2467
    %2631 = vmatpush1.bf16.msra.mxu0 %v2466
    %2632 = vmatprep.subr.bf16.mxu0 %v2474
    %2633 = vmatpush1.bf16.msra.mxu0 %v2473
    %2634 = vmatprep.subr.bf16.mxu0 %v2481
    %2635 = vmatpush1.bf16.msra.mxu0 %v2480
    %2636 = vmatprep.subr.bf16.mxu0 %v2488
    %2637 = vmatpush1.bf16.msra.mxu0 %v2487
    %2638 = vmatprep.mubr.bf16.mxu0 %v1993
    %2639 = vmatmul.mubr.bf16.gmra.mrb[0].mxu0 %v1992
    %v2640 = vpop.f32.mrb[0].mxu0
    %v2641 = vadd.f32 %v1998, %v2640
    %v2642 = vpop.f32.mrb[0].mxu0
    %v2643 = vadd.f32 %v2002, %v2642
    %v2644 = vpop.f32.mrb[0].mxu0
    %v2645 = vpop.f32.mrb[0].mxu0
    %2646 = vdwg.mxu0
    %2647 = vmatprep.subr.bf16.mxu0 %v2385
    %2648 = vmatpush1.bf16.msra.mxu0 %v2384
    %2649 = vmatprep.subr.bf16.mxu0 %v2392
    %2650 = vmatpush1.bf16.msra.mxu0 %v2391
    %2651 = vmatprep.subr.bf16.mxu0 %v2399
    %2652 = vmatpush1.bf16.msra.mxu0 %v2398
    %2653 = vmatprep.subr.bf16.mxu0 %v2406
    %2654 = vmatpush1.bf16.msra.mxu0 %v2405
    %2655 = vmatprep.subr.bf16.mxu0 %v2413
    %2656 = vmatpush1.bf16.msra.mxu0 %v2412
    %2657 = vmatprep.subr.bf16.mxu0 %v2420
    %2658 = vmatpush1.bf16.msra.mxu0 %v2419
    %2659 = vmatprep.subr.bf16.mxu0 %v2427
    %2660 = vmatpush1.bf16.msra.mxu0 %v2426
    %2661 = vmatprep.subr.bf16.mxu0 %v2434
    %2662 = vmatpush1.bf16.msra.mxu0 %v2433
    %2663 = vmatprep.subr.bf16.mxu0 %v2441
    %2664 = vmatpush1.bf16.msra.mxu0 %v2440
    %2665 = vmatprep.subr.bf16.mxu0 %v2448
    %2666 = vmatpush1.bf16.msra.mxu0 %v2447
    %2667 = vmatprep.subr.bf16.mxu0 %v2455
    %2668 = vmatpush1.bf16.msra.mxu0 %v2454
    %2669 = vmatprep.subr.bf16.mxu0 %v2462
    %2670 = vmatpush1.bf16.msra.mxu0 %v2461
    %2671 = vmatprep.subr.bf16.mxu0 %v2469
    %2672 = vmatpush1.bf16.msra.mxu0 %v2468
    %2673 = vmatprep.subr.bf16.mxu0 %v2476
    %2674 = vmatpush1.bf16.msra.mxu0 %v2475
    %2675 = vmatprep.subr.bf16.mxu0 %v2483
    %2676 = vmatpush1.bf16.msra.mxu0 %v2482
    %2677 = vmatprep.subr.bf16.mxu0 %v2490
    %2678 = vmatpush1.bf16.msra.mxu0 %v2489
    %2679 = vmatprep.mubr.bf16.mxu0 %v1993
    %2680 = vmatmul.mubr.bf16.gmra.mrb[0].mxu0 %v1992
    %v2681 = vpop.f32.mrb[0].mxu0
    %v2682 = vadd.f32 %v2006, %v2681
    %v2683 = vpop.f32.mrb[0].mxu0
    %v2684 = vadd.f32 %v2010, %v2683
    %v2685 = vpop.f32.mrb[0].mxu0
    %v2686 = vpop.f32.mrb[0].mxu0
    %2687 = vdwg.mxu0
    %2688 = vmatprep.subr.bf16.mxu0 %v2387
    %2689 = vmatpush1.bf16.msra.mxu0 %v2386
    %2690 = vmatprep.subr.bf16.mxu0 %v2394
    %2691 = vmatpush1.bf16.msra.mxu0 %v2393
    %2692 = vmatprep.subr.bf16.mxu0 %v2401
    %2693 = vmatpush1.bf16.msra.mxu0 %v2400
    %2694 = vmatprep.subr.bf16.mxu0 %v2408
    %2695 = vmatpush1.bf16.msra.mxu0 %v2407
    %2696 = vmatprep.subr.bf16.mxu0 %v2415
    %2697 = vmatpush1.bf16.msra.mxu0 %v2414
    %2698 = vmatprep.subr.bf16.mxu0 %v2422
    %2699 = vmatpush1.bf16.msra.mxu0 %v2421
    %2700 = vmatprep.subr.bf16.mxu0 %v2429
    %2701 = vmatpush1.bf16.msra.mxu0 %v2428
    %2702 = vmatprep.subr.bf16.mxu0 %v2436
    %2703 = vmatpush1.bf16.msra.mxu0 %v2435
    %2704 = vmatprep.subr.bf16.mxu0 %v2443
    %2705 = vmatpush1.bf16.msra.mxu0 %v2442
    %2706 = vmatprep.subr.bf16.mxu0 %v2450
    %2707 = vmatpush1.bf16.msra.mxu0 %v2449
    %2708 = vmatprep.subr.bf16.mxu0 %v2457
    %2709 = vmatpush1.bf16.msra.mxu0 %v2456
    %2710 = vmatprep.subr.bf16.mxu0 %v2464
    %2711 = vmatpush1.bf16.msra.mxu0 %v2463
    %2712 = vmatprep.subr.bf16.mxu0 %v2471
    %2713 = vmatpush1.bf16.msra.mxu0 %v2470
    %2714 = vmatprep.subr.bf16.mxu0 %v2478
    %2715 = vmatpush1.bf16.msra.mxu0 %v2477
    %2716 = vmatprep.subr.bf16.mxu0 %v2485
    %2717 = vmatpush1.bf16.msra.mxu0 %v2484
    %2718 = vmatprep.subr.bf16.mxu0 %v2492
    %2719 = vmatpush1.bf16.msra.mxu0 %v2491
    %2720 = vmatprep.mubr.bf16.mxu0 %v1993
    %2721 = vmatmul.mubr.bf16.gmra.mrb[0].mxu0 %v1992
    %v2722 = vpop.f32.mrb[0].mxu0
    %v2723 = vadd.f32 %v2014, %v2722
    %v2724 = vpop.f32.mrb[0].mxu0
    %v2725 = vadd.f32 %v2018, %v2724
    %v2726 = vpop.f32.mrb[0].mxu0
    %v2727 = vpop.f32.mrb[0].mxu0
    %2728 = vdwg.mxu0
    %2729 = vmatprep.subr.bf16.mxu0 0
    %2730 = vmatpush1.bf16.msra.mxu0 %v2388
    %2731 = vmatprep.subr.bf16.mxu0 0
    %2732 = vmatpush1.bf16.msra.mxu0 %v2395
    %2733 = vmatprep.subr.bf16.mxu0 0
    %2734 = vmatpush1.bf16.msra.mxu0 %v2402
    %2735 = vmatprep.subr.bf16.mxu0 0
    %2736 = vmatpush1.bf16.msra.mxu0 %v2409
    %2737 = vmatprep.subr.bf16.mxu0 0
    %2738 = vmatpush1.bf16.msra.mxu0 %v2416
    %2739 = vmatprep.subr.bf16.mxu0 0
    %2740 = vmatpush1.bf16.msra.mxu0 %v2423
    %2741 = vmatprep.subr.bf16.mxu0 0
    %2742 = vmatpush1.bf16.msra.mxu0 %v2430
    %2743 = vmatprep.subr.bf16.mxu0 0
    %2744 = vmatpush1.bf16.msra.mxu0 %v2437
    %2745 = vmatprep.subr.bf16.mxu0 0
    %2746 = vmatpush1.bf16.msra.mxu0 %v2444
    %2747 = vmatprep.subr.bf16.mxu0 0
    %2748 = vmatpush1.bf16.msra.mxu0 %v2451
    %2749 = vmatprep.subr.bf16.mxu0 0
    %2750 = vmatpush1.bf16.msra.mxu0 %v2458
    %2751 = vmatprep.subr.bf16.mxu0 0
    %2752 = vmatpush1.bf16.msra.mxu0 %v2465
    %2753 = vmatprep.subr.bf16.mxu0 0
    %2754 = vmatpush1.bf16.msra.mxu0 %v2472
    %2755 = vmatprep.subr.bf16.mxu0 0
    %2756 = vmatpush1.bf16.msra.mxu0 %v2479
    %2757 = vmatprep.subr.bf16.mxu0 0
    %2758 = vmatpush1.bf16.msra.mxu0 %v2486
    %2759 = vmatprep.subr.bf16.mxu0 0
    %2760 = vmatpush1.bf16.msra.mxu0 %v2493
    %2761 = vmatprep.mubr.bf16.mxu0 %v1993
    %2762 = vmatmul.mubr.bf16.gmra.mrb[0].mxu0 %v1992
    %v2763 = vpop.f32.mrb[0].mxu0
    %v2764 = vadd.f32 %v2022, %v2763
    %v2765 = vpop.f32.mrb[0].mxu0
    %v2766 = vpop.f32.mrb[0].mxu0
    %v2767 = vpop.f32.mrb[0].mxu0
    %2768 = vdwg.mxu0
    %v2769 = vmul.f32 %v2641, 0.5
    %v2770 = vmul.f32 %v2643, 0.5
    %v2771 = vmul.f32 %v2682, 0.5
    %v2772 = vmul.f32 %v2684, 0.5
    %v2773 = vmul.f32 %v2723, 0.5
    %v2774 = vmul.f32 %v2725, 0.5
    %v2775 = vmul.f32 %v2764, 0.5
    %v2776 = vtanh.pop %v2769
    %v2777 = vtanh.pop %v2770
    %v2778 = vtanh.pop %v2771
    %v2779 = vtanh.pop %v2772
    %v2780 = vtanh.pop %v2773
    %v2781 = vtanh.pop %v2774
    %v2782 = vtanh.pop %v2775
    %v2783 = vadd.f32 %v2776, 1.0
    %v2784 = vadd.f32 %v2777, 1.0
    %v2785 = vadd.f32 %v2778, 1.0
    %v2786 = vadd.f32 %v2779, 1.0
    %v2787 = vadd.f32 %v2780, 1.0
    %v2788 = vadd.f32 %v2781, 1.0
    %v2789 = vadd.f32 %v2782, 1.0
    %v2790 = vmul.f32 %v2783, 0.5
    %v2791 = vmul.f32 %v2784, 0.5
    %v2792 = vmul.f32 %v2785, 0.5
    %v2793 = vmul.f32 %v2786, 0.5
    %v2794 = vmul.f32 %v2787, 0.5
    %v2795 = vmul.f32 %v2788, 0.5
    %v2796 = vmul.f32 %v2789, 0.5
    %2797 = vst [vmem:[%s21] sm:$0xff] %v1367
    %2798 = vst [vmem:[#allocation2] sm:$0xff] %v2790
    %2799 = vst [vmem:[#allocation2 + $0x8] sm:$0xff] %v2791
    %2800 = vst [vmem:[#allocation2 + $0x10] sm:$0xff] %v2792
    %2801 = vst [vmem:[#allocation2 + $0x18] sm:$0xff] %v2793
    %2802 = vst [vmem:[#allocation2 + $0x20] sm:$0xff] %v2794
    %2803 = vst [vmem:[#allocation2 + $0x28] sm:$0xff] %v2795
    %2804 = vst.msk [vmem:[#allocation2 + $0x30] sm:$0xff] %vm686, %v2796
    // Predicated region
    $region86: #{autoencoder_forward.1} parent=1 // pred_check
      _
    $region87: #{autoencoder_forward.1} parent=1 // pred_check_branch
      %2806 = sbr.rel (0) target = $region89
    $region88: #{autoencoder_forward.1} parent=1 // pred_region
      _
    $region89: #{autoencoder_forward.1} parent=1 // pred_fallthru
      _
    // Predicated region
    $region90: #{autoencoder_forward.1} parent=1 // pred_check
      _
    $region91: #{autoencoder_forward.1} parent=1 // pred_check_branch
      %2808 = sbr.rel (0) target = $region93
    $region92: #{autoencoder_forward.1} parent=1 // pred_region
      %s2810 = ssub.s32 896, 896
      %2811 = vsyncadd [#allocation3], %s2810
      %s2813 = sshll.u32 [#allocation2], 4
      %s2814 = int_to_ptr.vmem [resolvable:$true] %s2813
      %2816 = dma.vmem_to_hbm [thread:$0]  %s2814, 896, %s22, [#allocation3]
    $region93: #{autoencoder_forward.1} parent=1 // pred_fallthru
      _
    // Predicated region
    $region94: #{autoencoder_forward.1} parent=1 // pred_check
      _
    $region95: #{autoencoder_forward.1} parent=1 // pred_check_branch
      %2818 = sbr.rel (0) target = $region97
    $region96: #{autoencoder_forward.1} parent=1 // pred_region
      _
    $region97: #{autoencoder_forward.1} parent=1 // pred_fallthru
      _
    // Predicated region
    $region98: #{autoencoder_forward.1} parent=1 // pred_check
      _
    $region99: #{autoencoder_forward.1} parent=1 // pred_check_branch
      %2820 = sbr.rel (0) target = $region101
    $region100: #{autoencoder_forward.1} parent=1 // pred_region
      %2821 = dma.done [#allocation3], 896
    $region101: #{autoencoder_forward.1} parent=1 // pred_fallthru
      _
    %2822 = vsyncpa [#allocation3], 1

</llo_original>
